<compile_context>
chip_gen: v7x
topology: tpu7x:2x2x1
jax: 0.10.0
libtpu: 0.0.40
codegen_flags: <defaults>
</compile_context>

<pallas_src>
import jax
import jax.numpy as jnp
from jax.experimental import pallas as pl
from jax.experimental.pallas import tpu as pltpu


def dgcnn_kernel(x_ref, a_ref, w_ref, chebw_ref, scale_ref, shift_ref, out_ref, gx_ref):
    """Processes a block of TB batch elements per grid step; all data resident in VMEM."""
    TB, N, F = x_ref.shape
    KF, Dout = chebw_ref.shape
    K = KF // F

    # --- BN1: BatchNorm1d(feature_len) in eval mode, folded to per-feature affine ---
    xb = x_ref[...] * scale_ref[...] + shift_ref[...]                       # (TB, N, F)

    # --- A_weighted = A @ W : single flattened MXU matmul, M = TB*N ---
    aw = jnp.dot(a_ref[...].reshape(TB * N, N), w_ref[...],
                 preferred_element_type=jnp.float32).reshape(TB, N, N)

    # --- normalize_A(A_weighted, lmax=2), simplified: Lnorm = -D^-1/2 A_sym D^-1/2 ---
    rows = jax.lax.broadcasted_iota(jnp.int32, (TB, N, N), 1)
    cols = jax.lax.broadcasted_iota(jnp.int32, (TB, N, N), 2)
    eyeb = (rows == cols).astype(jnp.float32)                               # batched identity
    m = jnp.maximum(aw, 0.0) * (1.0 - eyeb)                                 # relu + zero diag
    # m^T per batch via NT-form batched einsum against identity (avoids transpose relayout).
    mt = jnp.einsum('bik,bjk->bij', eyeb, m, preferred_element_type=jnp.float32)
    a_sym = m + mt                                                          # symmetric (TB,N,N)
    dinv_r = jax.lax.rsqrt(jnp.sum(a_sym, axis=2, keepdims=True) + 1e-10)   # (TB, N, 1)
    dinv_c = jax.lax.rsqrt(jnp.sum(a_sym, axis=1, keepdims=True) + 1e-10)   # (TB, 1, N)
    lnorm = -(dinv_r * a_sym * dinv_c)                                      # = 2L/2 - I

    # --- Chebynet: result = relu( sum_k  T_k(Lnorm) @ x @ W_k ) ---
    # TODO(synk): Chebynet/GraphConvolution source was not provided; this uses the canonical
    # DGCNN recurrence (support_0 = I, support_1 = L, support_k = support_{k-1} @ L, no bias),
    # expressed on z_k = support_k @ x, i.e. z_0 = x, z_k = Lnorm @ z_{k-1}.
    z = xb
    gx_ref[:, 0:F] = z.reshape(TB * N, F)          # k = 0: identity support, no matmul needed
    for k in range(1, K):
        z = jnp.einsum('bij,bjf->bif', lnorm, z, preferred_element_type=jnp.float32)
        gx_ref[:, k * F:(k + 1) * F] = z.reshape(TB * N, F)

    # Single fused projection: (TB*N, K*F) @ (K*F, Dout)
    res = jnp.dot(gx_ref[...], chebw_ref[...], preferred_element_type=jnp.float32)
    out_ref[...] = jnp.maximum(res, 0.0).reshape(TB, N, Dout)


def _choose_batch_tile(B, N):
    """TB*N ~ 256 MXU rows, but keep >= 2 grid steps (v7x dual TensorCores) and TB <= B."""
    tb = max(1, min(64, 256 // max(N, 1)))
    tb = min(tb, B)
    if B >= 2:
        tb = min(tb, (B + 1) // 2)
    return max(tb, 1)


def dgcnn_forward(x, A, W, cheb_w, bn_gamma, bn_beta, bn_mean, bn_var, eps=1e-5,
                  batch_tile=None):
    B, N, F = x.shape
    K, F2, Dout = cheb_w.shape
    assert F2 == F

    TB = batch_tile if batch_tile is not None else _choose_batch_tile(B, N)
    num_blocks = (B + TB - 1) // TB
    B_pad = num_blocks * TB
    x = x.astype(jnp.float32)
    A = A.astype(jnp.float32)
    if B_pad != B:
        pad = B_pad - B
        x = jnp.pad(x, ((0, pad), (0, 0), (0, 0)))
        A = jnp.pad(A, ((0, pad), (0, 0), (0, 0)))

    # Fold eval-mode BatchNorm1d into per-feature affine.
    inv_std = 1.0 / jnp.sqrt(bn_var + eps)
    scale = (bn_gamma * inv_std).reshape(1, F).astype(jnp.float32)
    shift = (bn_beta - bn_mean * bn_gamma * inv_std).reshape(1, F).astype(jnp.float32)
    cheb_flat = cheb_w.reshape(K * F, Dout).astype(jnp.float32)   # [k*F + f, d]

    out = pl.pallas_call(
        dgcnn_kernel,
        out_shape=jax.ShapeDtypeStruct((B_pad, N, Dout), jnp.float32),
        grid_spec=pltpu.PrefetchScalarGridSpec(
            num_scalar_prefetch=0,
            grid=(num_blocks,),
            in_specs=[
                pl.BlockSpec((TB, N, F), lambda b: (b, 0, 0)),       # x (batch-blocked)
                pl.BlockSpec((TB, N, N), lambda b: (b, 0, 0)),       # A (batch-blocked)
                pl.BlockSpec((N, N), lambda b: (0, 0)),              # W (shared)
                pl.BlockSpec((K * F, Dout), lambda b: (0, 0)),       # fused cheb weights
                pl.BlockSpec((1, F), lambda b: (0, 0)),              # BN scale
                pl.BlockSpec((1, F), lambda b: (0, 0)),              # BN shift
            ],
            out_specs=pl.BlockSpec((TB, N, Dout), lambda b: (b, 0, 0)),
            scratch_shapes=[pltpu.VMEM((TB * N, K * F), jnp.float32)],   # fused-gx slab
        ),
        compiler_params=pltpu.CompilerParams(dimension_semantics=("parallel",)),
    )(x, A, W.astype(jnp.float32), cheb_flat, scale, shift)

    # result.reshape(x.shape[0], -1); batch-pad rows (if any) are dropped.
    return out[:B].reshape(B, N * Dout)


def _dgcnn_reference(x, A, W, cheb_w, bn_gamma, bn_beta, bn_mean, bn_var, eps=1e-5):
    """Pure-JAX reference matching the PyTorch forward (eval-mode BN, powers recurrence)."""
    B, N, F = x.shape
    K, _, Dout = cheb_w.shape
    inv_std = 1.0 / jnp.sqrt(bn_var + eps)
    xb = x * (bn_gamma * inv_std) + (bn_beta - bn_mean * bn_gamma * inv_std)
    aw = jnp.einsum('bij,jk->bik', A, W)
    aw = jax.nn.relu(aw)
    eye = jnp.eye(N, dtype=jnp.float32)
    aw = aw * (1.0 - eye)
    aw = aw + jnp.swapaxes(aw, 1, 2)
    d = jnp.sum(aw, axis=2)
    dinv = 1.0 / jnp.sqrt(d + 1e-10)
    dad = aw * dinv[:, :, None] * dinv[:, None, :]
    L = eye[None] - dad
    lnorm = 2.0 * L / 2.0 - eye[None]
    supports = [jnp.broadcast_to(eye, (B, N, N)), lnorm]
    for _ in range(2, K):
        supports.append(jnp.einsum('bij,bjk->bik', supports[-1], lnorm))
    res = jnp.zeros((B, N, Dout), jnp.float32)
    for k in range(K):
        res = res + jnp.einsum('bij,bjf,fd->bid', supports[k], xb, cheb_w[k])
    return jax.nn.relu(res).reshape(B, -1)


if __name__ == "__main__":
    # Small shapes consistent with the module: feature_len=16, channels_num=8,
    # k_adj=3, dims_out=4, batch=8 (so the batch-blocked grid has 2 parallel steps).
    B, N, F, K, Dout = 8, 8, 16, 3, 4

    key = jax.random.PRNGKey(0)
    k1, k2, k3, k4, k5, k6 = jax.random.split(key, 6)

    x = jax.random.normal(k1, (B, N, F), dtype=jnp.float32)
    A = jax.random.uniform(k2, (B, N, N), dtype=jnp.float32)
    # self.W: nn.init.uniform_(W, 0.01, 0.5)
    W = jax.random.uniform(k3, (N, N), dtype=jnp.float32, minval=0.01, maxval=0.5)
    # Chebynet GraphConvolution weights (one per Chebyshev order)
    cheb_w = jax.random.normal(k4, (K, F, Dout), dtype=jnp.float32) * 0.1
    # BatchNorm1d(feature_len) parameters (eval mode)
    bn_gamma = jax.random.uniform(k5, (F,), dtype=jnp.float32, minval=0.5, maxval=1.5)
    bn_beta = jax.random.normal(k6, (F,), dtype=jnp.float32) * 0.1
    bn_mean = jnp.zeros((F,), dtype=jnp.float32)
    bn_var = jnp.ones((F,), dtype=jnp.float32)

    out = dgcnn_forward(x, A, W, cheb_w, bn_gamma, bn_beta, bn_mean, bn_var)
    out = jax.block_until_ready(out)
    assert out.shape == (B, N * Dout)

    ref = _dgcnn_reference(x, A, W, cheb_w, bn_gamma, bn_beta, bn_mean, bn_var)
    max_err = float(jnp.max(jnp.abs(out - ref)))
    assert max_err < 1e-2, max_err

    print("KERNEL_OK")
</pallas_src>

<mosaic_0001>
module attributes {stable_mosaic.version = 11 : i64} {
  func.func @dgcnn_kernel(%arg0: i32, %arg1: memref<4x8x16xf32, #tpu.memory_space<vmem>>, %arg2: memref<4x8x8xf32, #tpu.memory_space<vmem>>, %arg3: memref<8x8xf32, #tpu.memory_space<vmem>>, %arg4: memref<48x4xf32, #tpu.memory_space<vmem>>, %arg5: memref<1x16xf32, #tpu.memory_space<vmem>>, %arg6: memref<1x16xf32, #tpu.memory_space<vmem>>, %arg7: memref<4x8x4xf32, #tpu.memory_space<vmem>>, %arg8: memref<32x48xf32, #tpu.memory_space<vmem>>) attributes {dimension_semantics = [#tpu.dimension_semantics<parallel>], iteration_bounds = array<i64: 2>, scalar_prefetch = 0 : i64, scratch_operands = 1 : i64, tpu.core_type = #tpu.core_type<tc>, window_params = [{transform_indices = @transform_0, window_bounds = array<i64: 4, 8, 16>}, {transform_indices = @transform_1, window_bounds = array<i64: 4, 8, 8>}, {pipeline_mode = #tpu.pipeline_mode<synchronous>, transform_indices = @transform_2, window_bounds = array<i64: 8, 8>}, {pipeline_mode = #tpu.pipeline_mode<synchronous>, transform_indices = @transform_3, window_bounds = array<i64: 48, 4>}, {pipeline_mode = #tpu.pipeline_mode<synchronous>, transform_indices = @transform_4, window_bounds = array<i64: 1, 16>}, {pipeline_mode = #tpu.pipeline_mode<synchronous>, transform_indices = @transform_5, window_bounds = array<i64: 1, 16>}, {transform_indices = @transform_6, window_bounds = array<i64: 4, 8, 4>}]} {
    %c0 = arith.constant 0 : index
    %c0_0 = arith.constant 0 : index
    %c0_1 = arith.constant 0 : index
    %0 = vector.load %arg1[%c0, %c0_0, %c0_1] : memref<4x8x16xf32, #tpu.memory_space<vmem>>, vector<4x8x16xf32>
    %c0_2 = arith.constant 0 : index
    %c0_3 = arith.constant 0 : index
    %1 = vector.load %arg5[%c0_2, %c0_3] : memref<1x16xf32, #tpu.memory_space<vmem>>, vector<1x16xf32>
    %2 = vector.shape_cast %1 : vector<1x16xf32> to vector<1x1x16xf32>
    %3 = vector.broadcast %2 : vector<1x1x16xf32> to vector<4x8x16xf32>
    %4 = arith.mulf %0, %3 : vector<4x8x16xf32>
    %c0_4 = arith.constant 0 : index
    %c0_5 = arith.constant 0 : index
    %5 = vector.load %arg6[%c0_4, %c0_5] : memref<1x16xf32, #tpu.memory_space<vmem>>, vector<1x16xf32>
    %6 = vector.shape_cast %5 : vector<1x16xf32> to vector<1x1x16xf32>
    %7 = vector.broadcast %6 : vector<1x1x16xf32> to vector<4x8x16xf32>
    %8 = arith.addf %4, %7 : vector<4x8x16xf32>
    %c0_6 = arith.constant 0 : index
    %c0_7 = arith.constant 0 : index
    %c0_8 = arith.constant 0 : index
    %9 = vector.load %arg2[%c0_6, %c0_7, %c0_8] : memref<4x8x8xf32, #tpu.memory_space<vmem>>, vector<4x8x8xf32>
    %10 = vector.shape_cast %9 : vector<4x8x8xf32> to vector<32x8xf32>
    %c0_9 = arith.constant 0 : index
    %c0_10 = arith.constant 0 : index
    %11 = vector.load %arg3[%c0_9, %c0_10] : memref<8x8xf32, #tpu.memory_space<vmem>>, vector<8x8xf32>
    %cst = arith.constant dense<0.000000e+00> : vector<32x8xf32>
    %12 = tpu.matmul %10, %11, %cst {dimension_numbers = #tpu.dot_dimension_numbers<[1], [0], [0], [1], [0, 0, 1, 1], [], []>} : vector<32x8xf32>, vector<8x8xf32>, vector<32x8xf32> -> vector<32x8xf32>
    %13 = vector.shape_cast %12 : vector<32x8xf32> to vector<4x8x8xf32>
    %14 = tpu.iota {dimensions = array<i32: 1>} : vector<4x8x8xi32>
    %15 = tpu.iota {dimensions = array<i32: 2>} : vector<4x8x8xi32>
    %16 = arith.cmpi eq, %14, %15 : vector<4x8x8xi32>
    %17 = arith.extui %16 : vector<4x8x8xi1> to vector<4x8x8xi32>
    %18 = arith.sitofp %17 : vector<4x8x8xi32> to vector<4x8x8xf32>
    %cst_11 = arith.constant 0.000000e+00 : f32
    %19 = vector.broadcast %cst_11 : f32 to vector<4x8x8xf32>
    %20 = arith.maximumf %13, %19 : vector<4x8x8xf32>
    %cst_12 = arith.constant 1.000000e+00 : f32
    %21 = vector.broadcast %cst_12 : f32 to vector<4x8x8xf32>
    %22 = arith.subf %21, %18 : vector<4x8x8xf32>
    %23 = arith.mulf %20, %22 : vector<4x8x8xf32>
    "tpu.trace_start"() <{level = 10 : i32, message = "bik,bjk->bij"}> : () -> ()
    %cst_13 = arith.constant dense<0.000000e+00> : vector<4x8x8xf32>
    %24 = tpu.matmul %18, %23, %cst_13 {dimension_numbers = #tpu.dot_dimension_numbers<[2], [2], [1], [1], [0, 0, 0, 1, 1, 1], [0], [0]>} : vector<4x8x8xf32>, vector<4x8x8xf32>, vector<4x8x8xf32> -> vector<4x8x8xf32>
    "tpu.trace_stop"() : () -> ()
    %25 = arith.addf %23, %24 : vector<4x8x8xf32>
    %cst_14 = arith.constant dense<0.000000e+00> : vector<4x8xf32>
    %26 = vector.multi_reduction <add>, %25, %cst_14 [2] : vector<4x8x8xf32> to vector<4x8xf32>
    %27 = vector.shape_cast %26 : vector<4x8xf32> to vector<4x8x1xf32>
    %cst_15 = arith.constant 1.000000e-10 : f32
    %28 = vector.broadcast %cst_15 : f32 to vector<4x8x1xf32>
    %29 = arith.addf %27, %28 : vector<4x8x1xf32>
    %30 = math.rsqrt %29 : vector<4x8x1xf32>
    %cst_16 = arith.constant dense<0.000000e+00> : vector<4x8xf32>
    %31 = vector.multi_reduction <add>, %25, %cst_16 [1] : vector<4x8x8xf32> to vector<4x8xf32>
    %32 = vector.shape_cast %31 : vector<4x8xf32> to vector<4x1x8xf32>
    %cst_17 = arith.constant 1.000000e-10 : f32
    %33 = vector.broadcast %cst_17 : f32 to vector<4x1x8xf32>
    %34 = arith.addf %32, %33 : vector<4x1x8xf32>
    %35 = math.rsqrt %34 : vector<4x1x8xf32>
    %36 = vector.broadcast %30 : vector<4x8x1xf32> to vector<4x8x8xf32>
    %37 = arith.mulf %36, %25 : vector<4x8x8xf32>
    %38 = vector.broadcast %35 : vector<4x1x8xf32> to vector<4x8x8xf32>
    %39 = arith.mulf %37, %38 : vector<4x8x8xf32>
    %cst_18 = arith.constant 0.000000e+00 : f32
    %40 = vector.broadcast %cst_18 : f32 to vector<4x8x8xf32>
    %41 = arith.subf %40, %39 : vector<4x8x8xf32>
    %42 = vector.shape_cast %8 : vector<4x8x16xf32> to vector<32x16xf32>
    %c0_19 = arith.constant 0 : index
    %c0_20 = arith.constant 0 : index
    %43 = vector.load %arg8[%c0_19, %c0_20] : memref<32x48xf32, #tpu.memory_space<vmem>>, vector<32x16xf32>
    tpu.vector_store %arg8[%c0_19, %c0_20], %42 {strides = array<i32>} : memref<32x48xf32, #tpu.memory_space<vmem>>, vector<32x16xf32>,
    "tpu.trace_start"() <{level = 10 : i32, message = "bij,bjf->bif"}> : () -> ()
    %cst_21 = arith.constant dense<0.000000e+00> : vector<4x8x16xf32>
    %44 = tpu.matmul %41, %8, %cst_21 {dimension_numbers = #tpu.dot_dimension_numbers<[2], [1], [1], [2], [0, 0, 0, 1, 1, 2], [0], [0]>} : vector<4x8x8xf32>, vector<4x8x16xf32>, vector<4x8x16xf32> -> vector<4x8x16xf32>
    "tpu.trace_stop"() : () -> ()
    %45 = vector.shape_cast %44 : vector<4x8x16xf32> to vector<32x16xf32>
    %c0_22 = arith.constant 0 : index
    %c16 = arith.constant 16 : index
    %46 = vector.load %arg8[%c0_22, %c16] : memref<32x48xf32, #tpu.memory_space<vmem>>, vector<32x16xf32>
    tpu.vector_store %arg8[%c0_22, %c16], %45 {strides = array<i32>} : memref<32x48xf32, #tpu.memory_space<vmem>>, vector<32x16xf32>,
    "tpu.trace_start"() <{level = 10 : i32, message = "bij,bjf->bif"}> : () -> ()
    %cst_23 = arith.constant dense<0.000000e+00> : vector<4x8x16xf32>
    %47 = tpu.matmul %41, %44, %cst_23 {dimension_numbers = #tpu.dot_dimension_numbers<[2], [1], [1], [2], [0, 0, 0, 1, 1, 2], [0], [0]>} : vector<4x8x8xf32>, vector<4x8x16xf32>, vector<4x8x16xf32> -> vector<4x8x16xf32>
    "tpu.trace_stop"() : () -> ()
    %48 = vector.shape_cast %47 : vector<4x8x16xf32> to vector<32x16xf32>
    %c0_24 = arith.constant 0 : index
    %c32 = arith.constant 32 : index
    %49 = vector.load %arg8[%c0_24, %c32] : memref<32x48xf32, #tpu.memory_space<vmem>>, vector<32x16xf32>
    tpu.vector_store %arg8[%c0_24, %c32], %48 {strides = array<i32>} : memref<32x48xf32, #tpu.memory_space<vmem>>, vector<32x16xf32>,
    %c0_25 = arith.constant 0 : index
    %c0_26 = arith.constant 0 : index
    %50 = vector.load %arg8[%c0_25, %c0_26] : memref<32x48xf32, #tpu.memory_space<vmem>>, vector<32x48xf32>
    %c0_27 = arith.constant 0 : index
    %c0_28 = arith.constant 0 : index
    %51 = vector.load %arg4[%c0_27, %c0_28] : memref<48x4xf32, #tpu.memory_space<vmem>>, vector<48x4xf32>
    %cst_29 = arith.constant dense<0.000000e+00> : vector<32x4xf32>
    %52 = tpu.matmul %50, %51, %cst_29 {dimension_numbers = #tpu.dot_dimension_numbers<[1], [0], [0], [1], [0, 0, 1, 1], [], []>} : vector<32x48xf32>, vector<48x4xf32>, vector<32x4xf32> -> vector<32x4xf32>
    %cst_30 = arith.constant 0.000000e+00 : f32
    %53 = vector.broadcast %cst_30 : f32 to vector<32x4xf32>
    %54 = arith.maximumf %52, %53 : vector<32x4xf32>
    %55 = vector.shape_cast %54 : vector<32x4xf32> to vector<4x8x4xf32>
    %c0_31 = arith.constant 0 : index
    %c0_32 = arith.constant 0 : index
    %c0_33 = arith.constant 0 : index
    %56 = vector.load %arg7[%c0_31, %c0_32, %c0_33] : memref<4x8x4xf32, #tpu.memory_space<vmem>>, vector<4x8x4xf32>
    tpu.vector_store %arg7[%c0_31, %c0_32, %c0_33], %55 {strides = array<i32>} : memref<4x8x4xf32, #tpu.memory_space<vmem>>, vector<4x8x4xf32>,
    return
  }
  func.func @transform_0(%arg0: i32) -> (i32, i32, i32) {
    %c0_i32 = arith.constant 0 : i32
    %c0_i32_0 = arith.constant 0 : i32
    %c0_i32_1 = arith.constant 0 : i32
    return %arg0, %c0_i32, %c0_i32_0 : i32, i32, i32
  }
  func.func @transform_1(%arg0: i32) -> (i32, i32, i32) {
    %c0_i32 = arith.constant 0 : i32
    %c0_i32_0 = arith.constant 0 : i32
    %c0_i32_1 = arith.constant 0 : i32
    return %arg0, %c0_i32, %c0_i32_0 : i32, i32, i32
  }
  func.func @transform_2(%arg0: i32) -> (i32, i32) {
    %c0_i32 = arith.constant 0 : i32
    %c0_i32_0 = arith.constant 0 : i32
    %c0_i32_1 = arith.constant 0 : i32
    return %c0_i32, %c0_i32_0 : i32, i32
  }
  func.func @transform_3(%arg0: i32) -> (i32, i32) {
    %c0_i32 = arith.constant 0 : i32
    %c0_i32_0 = arith.constant 0 : i32
    %c0_i32_1 = arith.constant 0 : i32
    return %c0_i32, %c0_i32_0 : i32, i32
  }
  func.func @transform_4(%arg0: i32) -> (i32, i32) {
    %c0_i32 = arith.constant 0 : i32
    %c0_i32_0 = arith.constant 0 : i32
    %c0_i32_1 = arith.constant 0 : i32
    return %c0_i32, %c0_i32_0 : i32, i32
  }
  func.func @transform_5(%arg0: i32) -> (i32, i32) {
    %c0_i32 = arith.constant 0 : i32
    %c0_i32_0 = arith.constant 0 : i32
    %c0_i32_1 = arith.constant 0 : i32
    return %c0_i32, %c0_i32_0 : i32, i32
  }
  func.func @transform_6(%arg0: i32) -> (i32, i32, i32) {
    %c0_i32 = arith.constant 0 : i32
    %c0_i32_0 = arith.constant 0 : i32
    %c0_i32_1 = arith.constant 0 : i32
    return %arg0, %c0_i32, %c0_i32_0 : i32, i32, i32
  }
}

</mosaic_0001>

<llo_original>
// kernel: tpu_custom_call.1
$region0: #{tpu_custom_call.1}
  #allocation0 [shape = 'u32[]', space=smem, size = 0x4, offset = 0x4, fixed_abs, tag = 'smem constant byte address 0x4 - core index']
  #allocation1 [shape = 'u32[144,128]{1,0:T(1,128)}', space=vmem, size = 0x12000, scoped, tag = 'internal scratch']
  #allocation2 [shape = 'f32[32,48]{1,0:T(8,128)}', space=vmem, size = 0x4000, scoped, tag = 'scratch operand']
  %s0 = inlined_call_operand.hbm [shape: f32[8,8,16], index: 0, kind: input, shape index: {}]
  %s1 = inlined_call_operand.hbm [shape: f32[8,8,8], index: 1, kind: input, shape index: {}]
  %s2 = inlined_call_operand.vmem [shape: f32[8,8], index: 2, kind: input, shape index: {}]
  %s3 = inlined_call_operand.vmem [shape: f32[48,4], index: 3, kind: input, shape index: {}]
  %s4 = inlined_call_operand.vmem [shape: f32[1,16], index: 4, kind: input, shape index: {}]
  %s5 = inlined_call_operand.vmem [shape: f32[1,16], index: 5, kind: input, shape index: {}]
  %s6 = inlined_call_operand.vmem [shape: f32[8,8,4], index: 6, kind: output, shape index: {}]
  %s7 = sld [smem:[#allocation0]]
  $region65: #{tpu_custom_call.1} parent=0
    _
  %s9 = ssub.s32 1, %s7
  %s10 = scalar_select 0, %s9, %s7
  $region1: #{tpu_custom_call.1} parent=0
    #allocation3 [shape = 'u8[32768]{0}', space=vmem, size = 0x8000, scoped, tag = 'input window, operand 0']
    #allocation4 [shape = 's32[2]{0}', space=sflag, size = 0x8, scoped, tag = 'scoped memory for tpu_custom_call.1']
    #allocation5 [shape = 'u8[32768]{0}', space=vmem, size = 0x8000, scoped, tag = 'input window, operand 1']
    #allocation6 [shape = 's32[2]{0}', space=sflag, size = 0x8, scoped, tag = 'scoped memory for tpu_custom_call.1']
    %11 = vsyncpa [#allocation4], 0
    %s12 = scalar_lea.sflag [#allocation4], 1
    %13 = vsyncpa %s12, 0
    %14 = vsyncpa [#allocation6], 0
    %s15 = scalar_lea.sflag [#allocation6], 1
    %16 = vsyncpa %s15, 0
    loop: start=0, step=1, limit=4
    $region2: #{tpu_custom_call.1} parent=1 // loop_pre_header
      _
    $region3: #{tpu_custom_call.1} parent=1 // loop_header
      %s18 = sphi 0, %s22
      %p19 = scmp.ge.s32.totalorder %s18, 4
      %s28 = sphi 0, %s30
      %s31 = sphi 0, %s28
      %s32 = sphi 0, %s31
      %s48 = sphi 0, %s32
      %s54 = sphi 0, %s56
      %s57 = sphi 0, %s54
      %s58 = sphi 0, %s57
      %s74 = sphi 0, %s58
      %s78 = sphi 0, %s78
      %s80 = sphi 0, %s78
      %s81 = sphi 0, %s80
      %s95 = sphi 0, %s81
      %s99 = sphi 0, %s99
      %s101 = sphi 0, %s99
      %s102 = sphi 0, %s101
      %s116 = sphi 0, %s102
      %s120 = sphi 0, %s120
      %s122 = sphi 0, %s120
      %s123 = sphi 0, %s122
      %s137 = sphi 0, %s123
      %s141 = sphi 0, %s141
      %s143 = sphi 0, %s141
      %s144 = sphi 0, %s143
      %s158 = sphi 0, %s144
      %s164 = sphi 0, %s166
      %s167 = sphi 0, %s164
      %s168 = sphi 0, %s167
      %s184 = sphi 0, %s168
    $region4: #{tpu_custom_call.1} parent=1 // loop_header_branch
      %21 = sbr.rel (%p19) target = $region8
    $region5: #{tpu_custom_call.1} parent=1 // loop_body
      %s23 = ssub.s32 %s18, 1
      %s24 = ssub.s32 %s18, 2
      %s25 = sadd.s32 %s18, 1
      %s26 = ssub.s32 %s18, %s25
      %p27 = scmp.eq.s32.totalorder %s26, 0
      %s29 = sadd.s32 %s28, 1
      %s30 = scalar_select %p27, %s28, %s29
      %p33 = pneg %p27
      %p34 = scmp.eq.s32.totalorder %s18, 1
      %p35 = por %p33, %p34
      %p36 = scmp.ne.s32.totalorder %s28, %s31
      %p37 = scmp.eq.s32.totalorder %s18, 0
      %p38 = por %p36, %p37
      %p39 = scmp.ne.s32.totalorder %s28, %s31
      %p40 = scmp.eq.s32.totalorder %s23, 1
      %p41 = por %p39, %p40
      %p42 = scmp.ne.s32.totalorder %s31, %s32
      %p43 = scmp.eq.s32.totalorder %s23, 0
      %p44 = por %p42, %p43
      %p45 = scmp.ne.s32.totalorder %s31, %s32
      %p46 = scmp.eq.s32.totalorder %s24, 1
      %p47 = por %p45, %p46
      %p49 = scmp.ne.s32.totalorder %s32, %s48
      %p50 = scmp.eq.s32.totalorder %s24, 0
      %p51 = por %p49, %p50
      %s52 = ssub.s32 %s18, %s25
      %p53 = scmp.eq.s32.totalorder %s52, 0
      %s55 = sadd.s32 %s54, 1
      %s56 = scalar_select %p53, %s54, %s55
      %p59 = pneg %p53
      %p60 = scmp.eq.s32.totalorder %s18, 1
      %p61 = por %p59, %p60
      %p62 = scmp.ne.s32.totalorder %s54, %s57
      %p63 = scmp.eq.s32.totalorder %s18, 0
      %p64 = por %p62, %p63
      %p65 = scmp.ne.s32.totalorder %s54, %s57
      %p66 = scmp.eq.s32.totalorder %s23, 1
      %p67 = por %p65, %p66
      %p68 = scmp.ne.s32.totalorder %s57, %s58
      %p69 = scmp.eq.s32.totalorder %s23, 0
      %p70 = por %p68, %p69
      %p71 = scmp.ne.s32.totalorder %s57, %s58
      %p72 = scmp.eq.s32.totalorder %s24, 1
      %p73 = por %p71, %p72
      %p75 = scmp.ne.s32.totalorder %s58, %s74
      %p76 = scmp.eq.s32.totalorder %s24, 0
      %p77 = por %p75, %p76
      %s79 = sadd.s32 %s78, 1
      %p82 = scmp.eq.s32.totalorder %s18, 1
      %p83 = scmp.ne.s32.totalorder %s78, %s80
      %p84 = scmp.eq.s32.totalorder %s18, 0
      %p85 = por %p83, %p84
      %p86 = scmp.ne.s32.totalorder %s78, %s80
      %p87 = scmp.eq.s32.totalorder %s23, 1
      %p88 = por %p86, %p87
      %p89 = scmp.ne.s32.totalorder %s80, %s81
      %p90 = scmp.eq.s32.totalorder %s23, 0
      %p91 = por %p89, %p90
      %p92 = scmp.ne.s32.totalorder %s80, %s81
      %p93 = scmp.eq.s32.totalorder %s24, 1
      %p94 = por %p92, %p93
      %p96 = scmp.ne.s32.totalorder %s81, %s95
      %p97 = scmp.eq.s32.totalorder %s24, 0
      %p98 = por %p96, %p97
      %s100 = sadd.s32 %s99, 1
      %p103 = scmp.eq.s32.totalorder %s18, 1
      %p104 = scmp.ne.s32.totalorder %s99, %s101
      %p105 = scmp.eq.s32.totalorder %s18, 0
      %p106 = por %p104, %p105
      %p107 = scmp.ne.s32.totalorder %s99, %s101
      %p108 = scmp.eq.s32.totalorder %s23, 1
      %p109 = por %p107, %p108
      %p110 = scmp.ne.s32.totalorder %s101, %s102
      %p111 = scmp.eq.s32.totalorder %s23, 0
      %p112 = por %p110, %p111
      %p113 = scmp.ne.s32.totalorder %s101, %s102
      %p114 = scmp.eq.s32.totalorder %s24, 1
      %p115 = por %p113, %p114
      %p117 = scmp.ne.s32.totalorder %s102, %s116
      %p118 = scmp.eq.s32.totalorder %s24, 0
      %p119 = por %p117, %p118
      %s121 = sadd.s32 %s120, 1
      %p124 = scmp.eq.s32.totalorder %s18, 1
      %p125 = scmp.ne.s32.totalorder %s120, %s122
      %p126 = scmp.eq.s32.totalorder %s18, 0
      %p127 = por %p125, %p126
      %p128 = scmp.ne.s32.totalorder %s120, %s122
      %p129 = scmp.eq.s32.totalorder %s23, 1
      %p130 = por %p128, %p129
      %p131 = scmp.ne.s32.totalorder %s122, %s123
      %p132 = scmp.eq.s32.totalorder %s23, 0
      %p133 = por %p131, %p132
      %p134 = scmp.ne.s32.totalorder %s122, %s123
      %p135 = scmp.eq.s32.totalorder %s24, 1
      %p136 = por %p134, %p135
      %p138 = scmp.ne.s32.totalorder %s123, %s137
      %p139 = scmp.eq.s32.totalorder %s24, 0
      %p140 = por %p138, %p139
      %s142 = sadd.s32 %s141, 1
      %p145 = scmp.eq.s32.totalorder %s18, 1
      %p146 = scmp.ne.s32.totalorder %s141, %s143
      %p147 = scmp.eq.s32.totalorder %s18, 0
      %p148 = por %p146, %p147
      %p149 = scmp.ne.s32.totalorder %s141, %s143
      %p150 = scmp.eq.s32.totalorder %s23, 1
      %p151 = por %p149, %p150
      %p152 = scmp.ne.s32.totalorder %s143, %s144
      %p153 = scmp.eq.s32.totalorder %s23, 0
      %p154 = por %p152, %p153
      %p155 = scmp.ne.s32.totalorder %s143, %s144
      %p156 = scmp.eq.s32.totalorder %s24, 1
      %p157 = por %p155, %p156
      %p159 = scmp.ne.s32.totalorder %s144, %s158
      %p160 = scmp.eq.s32.totalorder %s24, 0
      %p161 = por %p159, %p160
      %s162 = ssub.s32 %s18, %s25
      %p163 = scmp.eq.s32.totalorder %s162, 0
      %s165 = sadd.s32 %s164, 1
      %s166 = scalar_select %p163, %s164, %s165
      %p169 = pneg %p163
      %p170 = scmp.eq.s32.totalorder %s18, 1
      %p171 = por %p169, %p170
      %p172 = scmp.ne.s32.totalorder %s164, %s167
      %p173 = scmp.eq.s32.totalorder %s18, 0
      %p174 = por %p172, %p173
      %p175 = scmp.ne.s32.totalorder %s164, %s167
      %p176 = scmp.eq.s32.totalorder %s23, 1
      %p177 = por %p175, %p176
      %p178 = scmp.ne.s32.totalorder %s167, %s168
      %p179 = scmp.eq.s32.totalorder %s23, 0
      %p180 = por %p178, %p179
      %p181 = scmp.ne.s32.totalorder %s167, %s168
      %p182 = scmp.eq.s32.totalorder %s24, 1
      %p183 = por %p181, %p182
      %p185 = scmp.ne.s32.totalorder %s168, %s184
      %p186 = scmp.eq.s32.totalorder %s24, 0
      %p187 = por %p185, %p186
      %p188 = scmp.le.s32.totalorder 1, %s18
      %p189 = scmp.lt.s32.totalorder %s18, 3
      %p190 = pnand %p188, %p189
      %p191 = pneg %p190
      // Predicated region
      $region9: #{tpu_custom_call.1} parent=5 // pred_check
        _
      $region10: #{tpu_custom_call.1} parent=5 // pred_check_branch
        %193 = sbr.rel (%p190) target = $region12
      $region11: #{tpu_custom_call.1} parent=5 // pred_region
        %s194 = ssub.s32 %s18, 1
        // Predicated region
        $region13: #{tpu_custom_call.1} parent=11 // pred_check
          %p195 = pneg %p91
        $region14: #{tpu_custom_call.1} parent=11 // pred_check_branch
          %197 = sbr.rel (%p195) target = $region16
        $region15: #{tpu_custom_call.1} parent=11 // pred_region
          _
        $region16: #{tpu_custom_call.1} parent=11 // pred_fallthru
          _
        // Predicated region
        $region17: #{tpu_custom_call.1} parent=11 // pred_check
          %p198 = pneg %p112
        $region18: #{tpu_custom_call.1} parent=11 // pred_check_branch
          %200 = sbr.rel (%p198) target = $region20
        $region19: #{tpu_custom_call.1} parent=11 // pred_region
          _
        $region20: #{tpu_custom_call.1} parent=11 // pred_fallthru
          _
        // Predicated region
        $region21: #{tpu_custom_call.1} parent=11 // pred_check
          %p201 = pneg %p133
        $region22: #{tpu_custom_call.1} parent=11 // pred_check_branch
          %203 = sbr.rel (%p201) target = $region24
        $region23: #{tpu_custom_call.1} parent=11 // pred_region
          _
        $region24: #{tpu_custom_call.1} parent=11 // pred_fallthru
          _
        // Predicated region
        $region25: #{tpu_custom_call.1} parent=11 // pred_check
          %p204 = pneg %p154
        $region26: #{tpu_custom_call.1} parent=11 // pred_check_branch
          %206 = sbr.rel (%p204) target = $region28
        $region27: #{tpu_custom_call.1} parent=11 // pred_region
          _
        $region28: #{tpu_custom_call.1} parent=11 // pred_fallthru
          _
      $region12: #{tpu_custom_call.1} parent=5 // pred_fallthru
        _
      %p207 = scmp.lt.s32.totalorder %s18, 2
      // Predicated region
      $region29: #{tpu_custom_call.1} parent=5 // pred_check
        %p208 = pneg %p207
      $region30: #{tpu_custom_call.1} parent=5 // pred_check_branch
        %210 = sbr.rel (%p208) target = $region32
      $region31: #{tpu_custom_call.1} parent=5 // pred_region
        // Predicated region
        $region33: #{tpu_custom_call.1} parent=31 // pred_check
          %p211 = pneg %p38
        $region34: #{tpu_custom_call.1} parent=31 // pred_check_branch
          %213 = sbr.rel (%p211) target = $region36
        $region35: #{tpu_custom_call.1} parent=31 // pred_region
          %s214 = sand.u32 %s28, 1
          %s215 = scalar_lea.sflag [#allocation4], %s214
          %s216 = sand.u32 %s28, 1
          %s217 = smul.addr %s216, 32
          %s218 = scalar_lea.vmem [#allocation3], %s217
          %s219 = smul.u32 4, %s18
          %s221 = ssub.s32 512, 512
          %222 = vsyncadd %s215, %s221
          %s223 = smul.addr %s219, 128
          %s224 = scalar_lea.hbm %s0, %s223
          %s225 = sshll.u32 %s218, 4
          %s226 = int_to_ptr.vmem [resolvable:$true] %s225
          %231 = dma.hbm_to_vmem [thread:$0]  %s224, 512, %s226, %s215, 128, 128, 8
        $region36: #{tpu_custom_call.1} parent=31 // pred_fallthru
          _
        // Predicated region
        $region37: #{tpu_custom_call.1} parent=31 // pred_check
          %p232 = pneg %p64
        $region38: #{tpu_custom_call.1} parent=31 // pred_check_branch
          %234 = sbr.rel (%p232) target = $region40
        $region39: #{tpu_custom_call.1} parent=31 // pred_region
          %s235 = sand.u32 %s54, 1
          %s236 = scalar_lea.sflag [#allocation6], %s235
          %s237 = sand.u32 %s54, 1
          %s238 = smul.addr %s237, 32
          %s239 = scalar_lea.vmem [#allocation5], %s238
          %s240 = smul.u32 4, %s18
          %s242 = ssub.s32 512, 512
          %243 = vsyncadd %s236, %s242
          %s244 = smul.addr %s240, 128
          %s245 = scalar_lea.hbm %s1, %s244
          %s246 = sshll.u32 %s239, 4
          %s247 = int_to_ptr.vmem [resolvable:$true] %s246
          %252 = dma.hbm_to_vmem [thread:$0]  %s245, 512, %s247, %s236, 128, 128, 8
        $region40: #{tpu_custom_call.1} parent=31 // pred_fallthru
          _
      $region32: #{tpu_custom_call.1} parent=5 // pred_fallthru
        _
      %p253 = scmp.le.s32.totalorder 1, %s18
      %p254 = scmp.lt.s32.totalorder %s18, 3
      %p255 = pnand %p253, %p254
      %p256 = pneg %p255
      // Predicated region
      $region41: #{tpu_custom_call.1} parent=5 // pred_check
        _
      $region42: #{tpu_custom_call.1} parent=5 // pred_check_branch
        %258 = sbr.rel (%p255) target = $region44
      $region43: #{tpu_custom_call.1} parent=5 // pred_region
        %s259 = ssub.s32 %s18, 1
        %s260 = sand.u32 %s31, 1
        %s261 = scalar_lea.sflag [#allocation4], %s260
        %s262 = sand.u32 %s31, 1
        %s263 = smul.addr %s262, 32
        %s264 = scalar_lea.vmem [#allocation3], %s263
        // Predicated region
        $region45: #{tpu_custom_call.1} parent=43 // pred_check
          %p265 = pneg %p44
        $region46: #{tpu_custom_call.1} parent=43 // pred_check_branch
          %267 = sbr.rel (%p265) target = $region48
        $region47: #{tpu_custom_call.1} parent=43 // pred_region
          %268 = dma.done %s261, 512
        $region48: #{tpu_custom_call.1} parent=43 // pred_fallthru
          _
        %s269 = sand.u32 %s57, 1
        %s270 = scalar_lea.sflag [#allocation6], %s269
        %s271 = sand.u32 %s57, 1
        %s272 = smul.addr %s271, 32
        %s273 = scalar_lea.vmem [#allocation5], %s272
        // Predicated region
        $region49: #{tpu_custom_call.1} parent=43 // pred_check
          %p274 = pneg %p70
        $region50: #{tpu_custom_call.1} parent=43 // pred_check_branch
          %276 = sbr.rel (%p274) target = $region52
        $region51: #{tpu_custom_call.1} parent=43 // pred_region
          %277 = dma.done %s270, 512
        $region52: #{tpu_custom_call.1} parent=43 // pred_fallthru
          _
        %s278 = sand.u32 %s31, 1
        %s279 = scalar_lea.sflag [#allocation4], %s278
        %s280 = sand.u32 %s31, 1
        %s281 = smul.addr %s280, 32
        %s282 = scalar_lea.vmem [#allocation3], %s281
        %p283 = pneg %p44
        %p284 = pneg %p41
        %s285 = sand.u32 %s57, 1
        %s286 = scalar_lea.sflag [#allocation6], %s285
        %s287 = sand.u32 %s57, 1
        %s288 = smul.addr %s287, 32
        %s289 = scalar_lea.vmem [#allocation5], %s288
        %p290 = pneg %p70
        %p291 = pneg %p67
        %p292 = pneg %p91
        %p293 = pneg %p88
        %p294 = pneg %p112
        %p295 = pneg %p109
        %p296 = pneg %p133
        %p297 = pneg %p130
        %p298 = pneg %p154
        %p299 = pneg %p151
        %p300 = pneg %p180
        %p301 = pneg %p177
        %s302 = smul.u32 4, %s23
        %p303 = scmp.lt.s32.totalorder %s302, 7
        %s304 = scalar_select %p303, %s302, 7
        %s305 = smul.addr %s304, 8
        %s306 = scalar_lea.vmem %s6, %s305
        %s307 = smul.u32 4, %s23
        %s308 = smul.u32 4, %s23
        %s309 = smul.u32 4, %s23
        %p310 = scmp.lt.s32.totalorder %s309, 7
        %s311 = scalar_select %p310, %s309, 7
        %s312 = smul.addr %s311, 8
        %s313 = scalar_lea.vmem %s6, %s312
        %s314 = smul.u32 4, %s23
        %v315 = vld [vmem:[%s264] sm:$0xff]
        %v316 = vld [vmem:[%s264 + $0x8] sm:$0xff]
        %v317 = vld [vmem:[%s264 + $0x10] sm:$0xff]
        %v318 = vld [vmem:[%s264 + $0x18] sm:$0xff]
        %v319 = vld [vmem:[%s4] sm:$0x1]
        %v321 = vlaneseq
        %v322 = vshrl.u32 %v321, 7
        %v323 = vsub.s32 0, %v322
        %v324 = vrot.slane %v319, %v323
        %v326 = vmul.f32 %v315, %v324
        %v327 = vmul.f32 %v316, %v324
        %v328 = vmul.f32 %v317, %v324
        %v329 = vmul.f32 %v318, %v324
        %v330 = vld [vmem:[%s5] sm:$0x1]
        %v332 = vlaneseq
        %v333 = vshrl.u32 %v332, 7
        %v334 = vsub.s32 0, %v333
        %v335 = vrot.slane %v330, %v334
        %v337 = vadd.f32 %v326, %v335
        %v338 = vadd.f32 %v327, %v335
        %v339 = vadd.f32 %v328, %v335
        %v340 = vadd.f32 %v329, %v335
        %v341 = vld [vmem:[%s273] sm:$0xff]
        %v342 = vld [vmem:[%s273 + $0x8] sm:$0xff]
        %v343 = vld [vmem:[%s273 + $0x10] sm:$0xff]
        %v344 = vld [vmem:[%s273 + $0x18] sm:$0xff]
        %v345 = vld [vmem:[%s2] sm:$0xff]
        %vm346 = vcmask 64512
        %v348 = vsel %vm346, %v341, 0
        %v351 = vsel %vm346, %v342, 0
        %v354 = vsel %vm346, %v343, 0
        %v357 = vsel %vm346, %v344, 0
        %359 = vmatprep.subr.mxu0 0.0
        %360 = vmatpush1.msra.mxu0 %v345
        %361 = vmatprep.subr.mxu0 0.0
        %362 = vmatpush1.msra.mxu0 0.0
        %363 = vmatprep.subr.mxu0 0.0
        %364 = vmatpush1.msra.mxu0 0.0
        %365 = vmatprep.subr.mxu0 0.0
        %366 = vmatpush1.msra.mxu0 0.0
        %367 = vmatprep.subr.mxu0 0.0
        %368 = vmatpush1.msra.mxu0 0.0
        %369 = vmatprep.subr.mxu0 0.0
        %370 = vmatpush1.msra.mxu0 0.0
        %371 = vmatprep.subr.mxu0 0.0
        %372 = vmatpush1.msra.mxu0 0.0
        %373 = vmatprep.subr.mxu0 0.0
        %374 = vmatpush1.msra.mxu0 0.0
        %375 = vmatprep.subr.mxu0 0.0
        %376 = vmatpush1.msra.mxu0 0.0
        %377 = vmatprep.subr.mxu0 0.0
        %378 = vmatpush1.msra.mxu0 0.0
        %379 = vmatprep.subr.mxu0 0.0
        %380 = vmatpush1.msra.mxu0 0.0
        %381 = vmatprep.subr.mxu0 0.0
        %382 = vmatpush1.msra.mxu0 0.0
        %383 = vmatprep.subr.mxu0 0.0
        %384 = vmatpush1.msra.mxu0 0.0
        %385 = vmatprep.subr.mxu0 0.0
        %386 = vmatpush1.msra.mxu0 0.0
        %387 = vmatprep.subr.mxu0 0.0
        %388 = vmatpush1.msra.mxu0 0.0
        %389 = vmatprep.subr.mxu0 0.0
        %390 = vmatpush1.msra.mxu0 0.0
        %391 = vmatprep.subr.mxu0 0.0
        %392 = vmatpush1.msra.mxu0 0.0
        %393 = vmatprep.subr.mxu0 0.0
        %394 = vmatpush1.msra.mxu0 0.0
        %395 = vmatprep.subr.mxu0 0.0
        %396 = vmatpush1.msra.mxu0 0.0
        %397 = vmatprep.subr.mxu0 0.0
        %398 = vmatpush1.msra.mxu0 0.0
        %399 = vmatprep.subr.mxu0 0.0
        %400 = vmatpush1.msra.mxu0 0.0
        %401 = vmatprep.subr.mxu0 0.0
        %402 = vmatpush1.msra.mxu0 0.0
        %403 = vmatprep.subr.mxu0 0.0
        %404 = vmatpush1.msra.mxu0 0.0
        %405 = vmatprep.subr.mxu0 0.0
        %406 = vmatpush1.msra.mxu0 0.0
        %407 = vmatprep.subr.mxu0 0.0
        %408 = vmatpush1.msra.mxu0 0.0
        %409 = vmatprep.subr.mxu0 0.0
        %410 = vmatpush1.msra.mxu0 0.0
        %411 = vmatprep.subr.mxu0 0.0
        %412 = vmatpush1.msra.mxu0 0.0
        %413 = vmatprep.subr.mxu0 0.0
        %414 = vmatpush1.msra.mxu0 0.0
        %415 = vmatprep.subr.mxu0 0.0
        %416 = vmatpush1.msra.mxu0 0.0
        %417 = vmatprep.subr.mxu0 0.0
        %418 = vmatpush1.msra.mxu0 0.0
        %419 = vmatprep.subr.mxu0 0.0
        %420 = vmatpush1.msra.mxu0 0.0
        %421 = vmatprep.subr.mxu0 0.0
        %422 = vmatpush1.msra.mxu0 0.0
        %423 = vmatprep.mubr.f32.mxu0 0.0
        %424 = vmatmul.mubr.f32.gmra.mrb[0].mxu0 %v348
        %v425 = vpop.f32.mrb[0].mxu0
        %v426 = vadd.f32 0.0, %v425
        %v427 = vpop.f32.mrb[0].mxu0
        %428 = vmatprep.mubr.f32.mxu0 0.0
        %429 = vmatmul.mubr.f32.gmra.mrb[0].mxu0 %v351
        %v430 = vpop.f32.mrb[0].mxu0
        %v431 = vadd.f32 0.0, %v430
        %v432 = vpop.f32.mrb[0].mxu0
        %433 = vmatprep.mubr.f32.mxu0 0.0
        %434 = vmatmul.mubr.f32.gmra.mrb[0].mxu0 %v354
        %v435 = vpop.f32.mrb[0].mxu0
        %v436 = vadd.f32 0.0, %v435
        %v437 = vpop.f32.mrb[0].mxu0
        %438 = vmatprep.mubr.f32.mxu0 0.0
        %439 = vmatmul.mubr.f32.gmra.mrb[0].mxu0 %v357
        %v440 = vpop.f32.mrb[0].mxu0
        %v441 = vadd.f32 0.0, %v440
        %v442 = vpop.f32.mrb[0].mxu0
        %443 = vdwg.mxu0
        %v444 = vlaneseq
        %v445 = vshrl.u32 %v444, 7
        %v446 = vlaneseq
        %v447 = vand.u32 %v446, 127
        %vm448 = vcmp.eq.s32.totalorder %v445, %v447
        %v449 = vsel %vm448, 1, 0
        %v450 = vcvt.s32.f32 %v449
        %v451 = vmax.f32 %v426, 0.0
        %v452 = vmax.f32 %v431, 0.0
        %v453 = vmax.f32 %v436, 0.0
        %v454 = vmax.f32 %v441, 0.0
        %v455 = vsub.f32 1.0, %v450
        %v456 = vmul.f32 %v451, %v455
        %v457 = vmul.f32 %v452, %v455
        %v458 = vmul.f32 %v453, %v455
        %v459 = vmul.f32 %v454, %v455
        %v461 = vsel %vm346, %v450, 0
        %v464 = vsel %vm346, %v456, 0
        %466 = vmatprep.subr.mxu0 0.0
        %467 = vmatpush1.xpose.msra.mxu0 %v464
        %468 = vmatprep.subr.mxu0 0.0
        %469 = vmatpush1.xpose.msra.mxu0 0.0
        %470 = vmatprep.subr.mxu0 0.0
        %471 = vmatpush1.xpose.msra.mxu0 0.0
        %472 = vmatprep.subr.mxu0 0.0
        %473 = vmatpush1.xpose.msra.mxu0 0.0
        %474 = vmatprep.subr.mxu0 0.0
        %475 = vmatpush1.xpose.msra.mxu0 0.0
        %476 = vmatprep.subr.mxu0 0.0
        %477 = vmatpush1.xpose.msra.mxu0 0.0
        %478 = vmatprep.subr.mxu0 0.0
        %479 = vmatpush1.xpose.msra.mxu0 0.0
        %480 = vmatprep.subr.mxu0 0.0
        %481 = vmatpush1.xpose.msra.mxu0 0.0
        %482 = vmatprep.subr.mxu0 0.0
        %483 = vmatpush1.xpose.msra.mxu0 0.0
        %484 = vmatprep.subr.mxu0 0.0
        %485 = vmatpush1.xpose.msra.mxu0 0.0
        %486 = vmatprep.subr.mxu0 0.0
        %487 = vmatpush1.xpose.msra.mxu0 0.0
        %488 = vmatprep.subr.mxu0 0.0
        %489 = vmatpush1.xpose.msra.mxu0 0.0
        %490 = vmatprep.subr.mxu0 0.0
        %491 = vmatpush1.xpose.msra.mxu0 0.0
        %492 = vmatprep.subr.mxu0 0.0
        %493 = vmatpush1.xpose.msra.mxu0 0.0
        %494 = vmatprep.subr.mxu0 0.0
        %495 = vmatpush1.xpose.msra.mxu0 0.0
        %496 = vmatprep.subr.mxu0 0.0
        %497 = vmatpush1.xpose.msra.mxu0 0.0
        %498 = vmatprep.subr.mxu0 0.0
        %499 = vmatpush1.xpose.msra.mxu0 0.0
        %500 = vmatprep.subr.mxu0 0.0
        %501 = vmatpush1.xpose.msra.mxu0 0.0
        %502 = vmatprep.subr.mxu0 0.0
        %503 = vmatpush1.xpose.msra.mxu0 0.0
        %504 = vmatprep.subr.mxu0 0.0
        %505 = vmatpush1.xpose.msra.mxu0 0.0
        %506 = vmatprep.subr.mxu0 0.0
        %507 = vmatpush1.xpose.msra.mxu0 0.0
        %508 = vmatprep.subr.mxu0 0.0
        %509 = vmatpush1.xpose.msra.mxu0 0.0
        %510 = vmatprep.subr.mxu0 0.0
        %511 = vmatpush1.xpose.msra.mxu0 0.0
        %512 = vmatprep.subr.mxu0 0.0
        %513 = vmatpush1.xpose.msra.mxu0 0.0
        %514 = vmatprep.subr.mxu0 0.0
        %515 = vmatpush1.xpose.msra.mxu0 0.0
        %516 = vmatprep.subr.mxu0 0.0
        %517 = vmatpush1.xpose.msra.mxu0 0.0
        %518 = vmatprep.subr.mxu0 0.0
        %519 = vmatpush1.xpose.msra.mxu0 0.0
        %520 = vmatprep.subr.mxu0 0.0
        %521 = vmatpush1.xpose.msra.mxu0 0.0
        %522 = vmatprep.subr.mxu0 0.0
        %523 = vmatpush1.xpose.msra.mxu0 0.0
        %524 = vmatprep.subr.mxu0 0.0
        %525 = vmatpush1.xpose.msra.mxu0 0.0
        %526 = vmatprep.subr.mxu0 0.0
        %527 = vmatpush1.xpose.msra.mxu0 0.0
        %528 = vmatprep.subr.mxu0 0.0
        %529 = vmatpush1.xpose.msra.mxu0 0.0
        %530 = vmatprep.mubr.f32.mxu0 0.0
        %531 = vmatmul.mubr.f32.gmra.mrb[0].mxu0 %v461
        %v532 = vpop.f32.mrb[0].mxu0
        %v533 = vadd.f32 0.0, %v532
        %v534 = vpop.f32.mrb[0].mxu0
        %535 = vdwg.mxu0
        %v537 = vsel %vm346, %v457, 0
        %539 = vmatprep.subr.mxu0 0.0
        %540 = vmatpush1.xpose.msra.mxu0 %v537
        %541 = vmatprep.subr.mxu0 0.0
        %542 = vmatpush1.xpose.msra.mxu0 0.0
        %543 = vmatprep.subr.mxu0 0.0
        %544 = vmatpush1.xpose.msra.mxu0 0.0
        %545 = vmatprep.subr.mxu0 0.0
        %546 = vmatpush1.xpose.msra.mxu0 0.0
        %547 = vmatprep.subr.mxu0 0.0
        %548 = vmatpush1.xpose.msra.mxu0 0.0
        %549 = vmatprep.subr.mxu0 0.0
        %550 = vmatpush1.xpose.msra.mxu0 0.0
        %551 = vmatprep.subr.mxu0 0.0
        %552 = vmatpush1.xpose.msra.mxu0 0.0
        %553 = vmatprep.subr.mxu0 0.0
        %554 = vmatpush1.xpose.msra.mxu0 0.0
        %555 = vmatprep.subr.mxu0 0.0
        %556 = vmatpush1.xpose.msra.mxu0 0.0
        %557 = vmatprep.subr.mxu0 0.0
        %558 = vmatpush1.xpose.msra.mxu0 0.0
        %559 = vmatprep.subr.mxu0 0.0
        %560 = vmatpush1.xpose.msra.mxu0 0.0
        %561 = vmatprep.subr.mxu0 0.0
        %562 = vmatpush1.xpose.msra.mxu0 0.0
        %563 = vmatprep.subr.mxu0 0.0
        %564 = vmatpush1.xpose.msra.mxu0 0.0
        %565 = vmatprep.subr.mxu0 0.0
        %566 = vmatpush1.xpose.msra.mxu0 0.0
        %567 = vmatprep.subr.mxu0 0.0
        %568 = vmatpush1.xpose.msra.mxu0 0.0
        %569 = vmatprep.subr.mxu0 0.0
        %570 = vmatpush1.xpose.msra.mxu0 0.0
        %571 = vmatprep.subr.mxu0 0.0
        %572 = vmatpush1.xpose.msra.mxu0 0.0
        %573 = vmatprep.subr.mxu0 0.0
        %574 = vmatpush1.xpose.msra.mxu0 0.0
        %575 = vmatprep.subr.mxu0 0.0
        %576 = vmatpush1.xpose.msra.mxu0 0.0
        %577 = vmatprep.subr.mxu0 0.0
        %578 = vmatpush1.xpose.msra.mxu0 0.0
        %579 = vmatprep.subr.mxu0 0.0
        %580 = vmatpush1.xpose.msra.mxu0 0.0
        %581 = vmatprep.subr.mxu0 0.0
        %582 = vmatpush1.xpose.msra.mxu0 0.0
        %583 = vmatprep.subr.mxu0 0.0
        %584 = vmatpush1.xpose.msra.mxu0 0.0
        %585 = vmatprep.subr.mxu0 0.0
        %586 = vmatpush1.xpose.msra.mxu0 0.0
        %587 = vmatprep.subr.mxu0 0.0
        %588 = vmatpush1.xpose.msra.mxu0 0.0
        %589 = vmatprep.subr.mxu0 0.0
        %590 = vmatpush1.xpose.msra.mxu0 0.0
        %591 = vmatprep.subr.mxu0 0.0
        %592 = vmatpush1.xpose.msra.mxu0 0.0
        %593 = vmatprep.subr.mxu0 0.0
        %594 = vmatpush1.xpose.msra.mxu0 0.0
        %595 = vmatprep.subr.mxu0 0.0
        %596 = vmatpush1.xpose.msra.mxu0 0.0
        %597 = vmatprep.subr.mxu0 0.0
        %598 = vmatpush1.xpose.msra.mxu0 0.0
        %599 = vmatprep.subr.mxu0 0.0
        %600 = vmatpush1.xpose.msra.mxu0 0.0
        %601 = vmatprep.subr.mxu0 0.0
        %602 = vmatpush1.xpose.msra.mxu0 0.0
        %603 = vmatprep.mubr.f32.mxu0 0.0
        %604 = vmatmul.mubr.f32.gmra.mrb[0].mxu0 %v461
        %v605 = vpop.f32.mrb[0].mxu0
        %v606 = vadd.f32 0.0, %v605
        %v607 = vpop.f32.mrb[0].mxu0
        %608 = vdwg.mxu0
        %v610 = vsel %vm346, %v458, 0
        %612 = vmatprep.subr.mxu0 0.0
        %613 = vmatpush1.xpose.msra.mxu0 %v610
        %614 = vmatprep.subr.mxu0 0.0
        %615 = vmatpush1.xpose.msra.mxu0 0.0
        %616 = vmatprep.subr.mxu0 0.0
        %617 = vmatpush1.xpose.msra.mxu0 0.0
        %618 = vmatprep.subr.mxu0 0.0
        %619 = vmatpush1.xpose.msra.mxu0 0.0
        %620 = vmatprep.subr.mxu0 0.0
        %621 = vmatpush1.xpose.msra.mxu0 0.0
        %622 = vmatprep.subr.mxu0 0.0
        %623 = vmatpush1.xpose.msra.mxu0 0.0
        %624 = vmatprep.subr.mxu0 0.0
        %625 = vmatpush1.xpose.msra.mxu0 0.0
        %626 = vmatprep.subr.mxu0 0.0
        %627 = vmatpush1.xpose.msra.mxu0 0.0
        %628 = vmatprep.subr.mxu0 0.0
        %629 = vmatpush1.xpose.msra.mxu0 0.0
        %630 = vmatprep.subr.mxu0 0.0
        %631 = vmatpush1.xpose.msra.mxu0 0.0
        %632 = vmatprep.subr.mxu0 0.0
        %633 = vmatpush1.xpose.msra.mxu0 0.0
        %634 = vmatprep.subr.mxu0 0.0
        %635 = vmatpush1.xpose.msra.mxu0 0.0
        %636 = vmatprep.subr.mxu0 0.0
        %637 = vmatpush1.xpose.msra.mxu0 0.0
        %638 = vmatprep.subr.mxu0 0.0
        %639 = vmatpush1.xpose.msra.mxu0 0.0
        %640 = vmatprep.subr.mxu0 0.0
        %641 = vmatpush1.xpose.msra.mxu0 0.0
        %642 = vmatprep.subr.mxu0 0.0
        %643 = vmatpush1.xpose.msra.mxu0 0.0
        %644 = vmatprep.subr.mxu0 0.0
        %645 = vmatpush1.xpose.msra.mxu0 0.0
        %646 = vmatprep.subr.mxu0 0.0
        %647 = vmatpush1.xpose.msra.mxu0 0.0
        %648 = vmatprep.subr.mxu0 0.0
        %649 = vmatpush1.xpose.msra.mxu0 0.0
        %650 = vmatprep.subr.mxu0 0.0
        %651 = vmatpush1.xpose.msra.mxu0 0.0
        %652 = vmatprep.subr.mxu0 0.0
        %653 = vmatpush1.xpose.msra.mxu0 0.0
        %654 = vmatprep.subr.mxu0 0.0
        %655 = vmatpush1.xpose.msra.mxu0 0.0
        %656 = vmatprep.subr.mxu0 0.0
        %657 = vmatpush1.xpose.msra.mxu0 0.0
        %658 = vmatprep.subr.mxu0 0.0
        %659 = vmatpush1.xpose.msra.mxu0 0.0
        %660 = vmatprep.subr.mxu0 0.0
        %661 = vmatpush1.xpose.msra.mxu0 0.0
        %662 = vmatprep.subr.mxu0 0.0
        %663 = vmatpush1.xpose.msra.mxu0 0.0
        %664 = vmatprep.subr.mxu0 0.0
        %665 = vmatpush1.xpose.msra.mxu0 0.0
        %666 = vmatprep.subr.mxu0 0.0
        %667 = vmatpush1.xpose.msra.mxu0 0.0
        %668 = vmatprep.subr.mxu0 0.0
        %669 = vmatpush1.xpose.msra.mxu0 0.0
        %670 = vmatprep.subr.mxu0 0.0
        %671 = vmatpush1.xpose.msra.mxu0 0.0
        %672 = vmatprep.subr.mxu0 0.0
        %673 = vmatpush1.xpose.msra.mxu0 0.0
        %674 = vmatprep.subr.mxu0 0.0
        %675 = vmatpush1.xpose.msra.mxu0 0.0
        %676 = vmatprep.mubr.f32.mxu0 0.0
        %677 = vmatmul.mubr.f32.gmra.mrb[0].mxu0 %v461
        %v678 = vpop.f32.mrb[0].mxu0
        %v679 = vadd.f32 0.0, %v678
        %v680 = vpop.f32.mrb[0].mxu0
        %681 = vdwg.mxu0
        %v683 = vsel %vm346, %v459, 0
        %685 = vmatprep.subr.mxu0 0.0
        %686 = vmatpush1.xpose.msra.mxu0 %v683
        %687 = vmatprep.subr.mxu0 0.0
        %688 = vmatpush1.xpose.msra.mxu0 0.0
        %689 = vmatprep.subr.mxu0 0.0
        %690 = vmatpush1.xpose.msra.mxu0 0.0
        %691 = vmatprep.subr.mxu0 0.0
        %692 = vmatpush1.xpose.msra.mxu0 0.0
        %693 = vmatprep.subr.mxu0 0.0
        %694 = vmatpush1.xpose.msra.mxu0 0.0
        %695 = vmatprep.subr.mxu0 0.0
        %696 = vmatpush1.xpose.msra.mxu0 0.0
        %697 = vmatprep.subr.mxu0 0.0
        %698 = vmatpush1.xpose.msra.mxu0 0.0
        %699 = vmatprep.subr.mxu0 0.0
        %700 = vmatpush1.xpose.msra.mxu0 0.0
        %701 = vmatprep.subr.mxu0 0.0
        %702 = vmatpush1.xpose.msra.mxu0 0.0
        %703 = vmatprep.subr.mxu0 0.0
        %704 = vmatpush1.xpose.msra.mxu0 0.0
        %705 = vmatprep.subr.mxu0 0.0
        %706 = vmatpush1.xpose.msra.mxu0 0.0
        %707 = vmatprep.subr.mxu0 0.0
        %708 = vmatpush1.xpose.msra.mxu0 0.0
        %709 = vmatprep.subr.mxu0 0.0
        %710 = vmatpush1.xpose.msra.mxu0 0.0
        %711 = vmatprep.subr.mxu0 0.0
        %712 = vmatpush1.xpose.msra.mxu0 0.0
        %713 = vmatprep.subr.mxu0 0.0
        %714 = vmatpush1.xpose.msra.mxu0 0.0
        %715 = vmatprep.subr.mxu0 0.0
        %716 = vmatpush1.xpose.msra.mxu0 0.0
        %717 = vmatprep.subr.mxu0 0.0
        %718 = vmatpush1.xpose.msra.mxu0 0.0
        %719 = vmatprep.subr.mxu0 0.0
        %720 = vmatpush1.xpose.msra.mxu0 0.0
        %721 = vmatprep.subr.mxu0 0.0
        %722 = vmatpush1.xpose.msra.mxu0 0.0
        %723 = vmatprep.subr.mxu0 0.0
        %724 = vmatpush1.xpose.msra.mxu0 0.0
        %725 = vmatprep.subr.mxu0 0.0
        %726 = vmatpush1.xpose.msra.mxu0 0.0
        %727 = vmatprep.subr.mxu0 0.0
        %728 = vmatpush1.xpose.msra.mxu0 0.0
        %729 = vmatprep.subr.mxu0 0.0
        %730 = vmatpush1.xpose.msra.mxu0 0.0
        %731 = vmatprep.subr.mxu0 0.0
        %732 = vmatpush1.xpose.msra.mxu0 0.0
        %733 = vmatprep.subr.mxu0 0.0
        %734 = vmatpush1.xpose.msra.mxu0 0.0
        %735 = vmatprep.subr.mxu0 0.0
        %736 = vmatpush1.xpose.msra.mxu0 0.0
        %737 = vmatprep.subr.mxu0 0.0
        %738 = vmatpush1.xpose.msra.mxu0 0.0
        %739 = vmatprep.subr.mxu0 0.0
        %740 = vmatpush1.xpose.msra.mxu0 0.0
        %741 = vmatprep.subr.mxu0 0.0
        %742 = vmatpush1.xpose.msra.mxu0 0.0
        %743 = vmatprep.subr.mxu0 0.0
        %744 = vmatpush1.xpose.msra.mxu0 0.0
        %745 = vmatprep.subr.mxu0 0.0
        %746 = vmatpush1.xpose.msra.mxu0 0.0
        %747 = vmatprep.subr.mxu0 0.0
        %748 = vmatpush1.xpose.msra.mxu0 0.0
        %749 = vmatprep.mubr.f32.mxu0 0.0
        %750 = vmatmul.mubr.f32.gmra.mrb[0].mxu0 %v461
        %v751 = vpop.f32.mrb[0].mxu0
        %v752 = vadd.f32 0.0, %v751
        %v753 = vpop.f32.mrb[0].mxu0
        %754 = vdwg.mxu0
        %v755 = vadd.f32 %v456, %v533
        %v756 = vadd.f32 %v457, %v606
        %v757 = vadd.f32 %v458, %v679
        %v758 = vadd.f32 %v459, %v752
        %v759 = vsel %vm346, %v755, 0.0
        %760 = vadd.xlane.f32.xlu0 %v759
        %v761 = vpop.xlane.xlu0 %760
        %v762 = vsel %vm346, %v756, 0.0
        %763 = vadd.xlane.f32.xlu0 %v762
        %v764 = vpop.xlane.xlu0 %763
        %v765 = vsel %vm346, %v757, 0.0
        %766 = vadd.xlane.f32.xlu0 %v765
        %v767 = vpop.xlane.xlu0 %766
        %v768 = vsel %vm346, %v758, 0.0
        %769 = vadd.xlane.f32.xlu0 %v768
        %v770 = vpop.xlane.xlu0 %769
        %v771 = vadd.f32 %v761, 1e-10
        %v772 = vadd.f32 %v764, 1e-10
        %v773 = vadd.f32 %v767, 1e-10
        %v774 = vadd.f32 %v770, 1e-10
        %v775 = vrsqrt.pop %v771
        %v776 = vrsqrt.pop %v772
        %v777 = vrsqrt.pop %v773
        %v778 = vrsqrt.pop %v774
        %v779 = vrot.slane %v759, 4
        %v780 = vadd.f32 %v759, %v779
        %v781 = vrot.slane %v780, 2
        %v782 = vadd.f32 %v780, %v781
        %v783 = vrot.slane %v782, 1
        %v784 = vadd.f32 %v782, %v783
        %v785 = vrot.slane %v762, 4
        %v786 = vadd.f32 %v762, %v785
        %v787 = vrot.slane %v786, 2
        %v788 = vadd.f32 %v786, %v787
        %v789 = vrot.slane %v788, 1
        %v790 = vadd.f32 %v788, %v789
        %v791 = vrot.slane %v765, 4
        %v792 = vadd.f32 %v765, %v791
        %v793 = vrot.slane %v792, 2
        %v794 = vadd.f32 %v792, %v793
        %v795 = vrot.slane %v794, 1
        %v796 = vadd.f32 %v794, %v795
        %v797 = vrot.slane %v768, 4
        %v798 = vadd.f32 %v768, %v797
        %v799 = vrot.slane %v798, 2
        %v800 = vadd.f32 %v798, %v799
        %v801 = vrot.slane %v800, 1
        %v802 = vadd.f32 %v800, %v801
        %v803 = vadd.f32 %v784, 1e-10
        %v804 = vadd.f32 %v790, 1e-10
        %v805 = vadd.f32 %v796, 1e-10
        %v806 = vadd.f32 %v802, 1e-10
        %v807 = vrsqrt.pop %v803
        %v808 = vrsqrt.pop %v804
        %v809 = vrsqrt.pop %v805
        %v810 = vrsqrt.pop %v806
        %v811 = vmul.f32 %v775, %v755
        %v812 = vmul.f32 %v776, %v756
        %v813 = vmul.f32 %v777, %v757
        %v814 = vmul.f32 %v778, %v758
        %v815 = vmul.f32 %v811, %v807
        %v816 = vmul.f32 %v812, %v808
        %v817 = vmul.f32 %v813, %v809
        %v818 = vmul.f32 %v814, %v810
        %v819 = vsub.f32 0.0, %v815
        %v820 = vsub.f32 0.0, %v816
        %v821 = vsub.f32 0.0, %v817
        %v822 = vsub.f32 0.0, %v818
        %vm823 = vcmask 130048
        %824 = vst.msk [vmem:[#allocation2] sm:$0xff] %vm823, %v337
        %825 = vst.msk [vmem:[#allocation2 + $0x8] sm:$0xff] %vm823, %v338
        %826 = vst.msk [vmem:[#allocation2 + $0x10] sm:$0xff] %vm823, %v339
        %827 = vst.msk [vmem:[#allocation2 + $0x18] sm:$0xff] %vm823, %v340
        %v829 = vsel %vm346, %v819, 0
        %831 = vmatprep.subr.mxu0 0.0
        %832 = vmatpush1.msra.mxu0 %v337
        %833 = vmatprep.subr.mxu0 0.0
        %834 = vmatpush1.msra.mxu0 0.0
        %835 = vmatprep.subr.mxu0 0.0
        %836 = vmatpush1.msra.mxu0 0.0
        %837 = vmatprep.subr.mxu0 0.0
        %838 = vmatpush1.msra.mxu0 0.0
        %839 = vmatprep.subr.mxu0 0.0
        %840 = vmatpush1.msra.mxu0 0.0
        %841 = vmatprep.subr.mxu0 0.0
        %842 = vmatpush1.msra.mxu0 0.0
        %843 = vmatprep.subr.mxu0 0.0
        %844 = vmatpush1.msra.mxu0 0.0
        %845 = vmatprep.subr.mxu0 0.0
        %846 = vmatpush1.msra.mxu0 0.0
        %847 = vmatprep.subr.mxu0 0.0
        %848 = vmatpush1.msra.mxu0 0.0
        %849 = vmatprep.subr.mxu0 0.0
        %850 = vmatpush1.msra.mxu0 0.0
        %851 = vmatprep.subr.mxu0 0.0
        %852 = vmatpush1.msra.mxu0 0.0
        %853 = vmatprep.subr.mxu0 0.0
        %854 = vmatpush1.msra.mxu0 0.0
        %855 = vmatprep.subr.mxu0 0.0
        %856 = vmatpush1.msra.mxu0 0.0
        %857 = vmatprep.subr.mxu0 0.0
        %858 = vmatpush1.msra.mxu0 0.0
        %859 = vmatprep.subr.mxu0 0.0
        %860 = vmatpush1.msra.mxu0 0.0
        %861 = vmatprep.subr.mxu0 0.0
        %862 = vmatpush1.msra.mxu0 0.0
        %863 = vmatprep.subr.mxu0 0.0
        %864 = vmatpush1.msra.mxu0 0.0
        %865 = vmatprep.subr.mxu0 0.0
        %866 = vmatpush1.msra.mxu0 0.0
        %867 = vmatprep.subr.mxu0 0.0
        %868 = vmatpush1.msra.mxu0 0.0
        %869 = vmatprep.subr.mxu0 0.0
        %870 = vmatpush1.msra.mxu0 0.0
        %871 = vmatprep.subr.mxu0 0.0
        %872 = vmatpush1.msra.mxu0 0.0
        %873 = vmatprep.subr.mxu0 0.0
        %874 = vmatpush1.msra.mxu0 0.0
        %875 = vmatprep.subr.mxu0 0.0
        %876 = vmatpush1.msra.mxu0 0.0
        %877 = vmatprep.subr.mxu0 0.0
        %878 = vmatpush1.msra.mxu0 0.0
        %879 = vmatprep.subr.mxu0 0.0
        %880 = vmatpush1.msra.mxu0 0.0
        %881 = vmatprep.subr.mxu0 0.0
        %882 = vmatpush1.msra.mxu0 0.0
        %883 = vmatprep.subr.mxu0 0.0
        %884 = vmatpush1.msra.mxu0 0.0
        %885 = vmatprep.subr.mxu0 0.0
        %886 = vmatpush1.msra.mxu0 0.0
        %887 = vmatprep.subr.mxu0 0.0
        %888 = vmatpush1.msra.mxu0 0.0
        %889 = vmatprep.subr.mxu0 0.0
        %890 = vmatpush1.msra.mxu0 0.0
        %891 = vmatprep.subr.mxu0 0.0
        %892 = vmatpush1.msra.mxu0 0.0
        %893 = vmatprep.subr.mxu0 0.0
        %894 = vmatpush1.msra.mxu0 0.0
        %895 = vmatprep.mubr.f32.mxu0 0.0
        %896 = vmatmul.mubr.f32.gmra.mrb[0].mxu0 %v829
        %v897 = vpop.f32.mrb[0].mxu0
        %v898 = vadd.f32 0.0, %v897
        %v899 = vpop.f32.mrb[0].mxu0
        %900 = vdwg.mxu0
        %v902 = vsel %vm346, %v820, 0
        %904 = vmatprep.subr.mxu0 0.0
        %905 = vmatpush1.msra.mxu0 %v338
        %906 = vmatprep.subr.mxu0 0.0
        %907 = vmatpush1.msra.mxu0 0.0
        %908 = vmatprep.subr.mxu0 0.0
        %909 = vmatpush1.msra.mxu0 0.0
        %910 = vmatprep.subr.mxu0 0.0
        %911 = vmatpush1.msra.mxu0 0.0
        %912 = vmatprep.subr.mxu0 0.0
        %913 = vmatpush1.msra.mxu0 0.0
        %914 = vmatprep.subr.mxu0 0.0
        %915 = vmatpush1.msra.mxu0 0.0
        %916 = vmatprep.subr.mxu0 0.0
        %917 = vmatpush1.msra.mxu0 0.0
        %918 = vmatprep.subr.mxu0 0.0
        %919 = vmatpush1.msra.mxu0 0.0
        %920 = vmatprep.subr.mxu0 0.0
        %921 = vmatpush1.msra.mxu0 0.0
        %922 = vmatprep.subr.mxu0 0.0
        %923 = vmatpush1.msra.mxu0 0.0
        %924 = vmatprep.subr.mxu0 0.0
        %925 = vmatpush1.msra.mxu0 0.0
        %926 = vmatprep.subr.mxu0 0.0
        %927 = vmatpush1.msra.mxu0 0.0
        %928 = vmatprep.subr.mxu0 0.0
        %929 = vmatpush1.msra.mxu0 0.0
        %930 = vmatprep.subr.mxu0 0.0
        %931 = vmatpush1.msra.mxu0 0.0
        %932 = vmatprep.subr.mxu0 0.0
        %933 = vmatpush1.msra.mxu0 0.0
        %934 = vmatprep.subr.mxu0 0.0
        %935 = vmatpush1.msra.mxu0 0.0
        %936 = vmatprep.subr.mxu0 0.0
        %937 = vmatpush1.msra.mxu0 0.0
        %938 = vmatprep.subr.mxu0 0.0
        %939 = vmatpush1.msra.mxu0 0.0
        %940 = vmatprep.subr.mxu0 0.0
        %941 = vmatpush1.msra.mxu0 0.0
        %942 = vmatprep.subr.mxu0 0.0
        %943 = vmatpush1.msra.mxu0 0.0
        %944 = vmatprep.subr.mxu0 0.0
        %945 = vmatpush1.msra.mxu0 0.0
        %946 = vmatprep.subr.mxu0 0.0
        %947 = vmatpush1.msra.mxu0 0.0
        %948 = vmatprep.subr.mxu0 0.0
        %949 = vmatpush1.msra.mxu0 0.0
        %950 = vmatprep.subr.mxu0 0.0
        %951 = vmatpush1.msra.mxu0 0.0
        %952 = vmatprep.subr.mxu0 0.0
        %953 = vmatpush1.msra.mxu0 0.0
        %954 = vmatprep.subr.mxu0 0.0
        %955 = vmatpush1.msra.mxu0 0.0
        %956 = vmatprep.subr.mxu0 0.0
        %957 = vmatpush1.msra.mxu0 0.0
        %958 = vmatprep.subr.mxu0 0.0
        %959 = vmatpush1.msra.mxu0 0.0
        %960 = vmatprep.subr.mxu0 0.0
        %961 = vmatpush1.msra.mxu0 0.0
        %962 = vmatprep.subr.mxu0 0.0
        %963 = vmatpush1.msra.mxu0 0.0
        %964 = vmatprep.subr.mxu0 0.0
        %965 = vmatpush1.msra.mxu0 0.0
        %966 = vmatprep.subr.mxu0 0.0
        %967 = vmatpush1.msra.mxu0 0.0
        %968 = vmatprep.mubr.f32.mxu0 0.0
        %969 = vmatmul.mubr.f32.gmra.mrb[0].mxu0 %v902
        %v970 = vpop.f32.mrb[0].mxu0
        %v971 = vadd.f32 0.0, %v970
        %v972 = vpop.f32.mrb[0].mxu0
        %973 = vdwg.mxu0
        %v975 = vsel %vm346, %v821, 0
        %977 = vmatprep.subr.mxu0 0.0
        %978 = vmatpush1.msra.mxu0 %v339
        %979 = vmatprep.subr.mxu0 0.0
        %980 = vmatpush1.msra.mxu0 0.0
        %981 = vmatprep.subr.mxu0 0.0
        %982 = vmatpush1.msra.mxu0 0.0
        %983 = vmatprep.subr.mxu0 0.0
        %984 = vmatpush1.msra.mxu0 0.0
        %985 = vmatprep.subr.mxu0 0.0
        %986 = vmatpush1.msra.mxu0 0.0
        %987 = vmatprep.subr.mxu0 0.0
        %988 = vmatpush1.msra.mxu0 0.0
        %989 = vmatprep.subr.mxu0 0.0
        %990 = vmatpush1.msra.mxu0 0.0
        %991 = vmatprep.subr.mxu0 0.0
        %992 = vmatpush1.msra.mxu0 0.0
        %993 = vmatprep.subr.mxu0 0.0
        %994 = vmatpush1.msra.mxu0 0.0
        %995 = vmatprep.subr.mxu0 0.0
        %996 = vmatpush1.msra.mxu0 0.0
        %997 = vmatprep.subr.mxu0 0.0
        %998 = vmatpush1.msra.mxu0 0.0
        %999 = vmatprep.subr.mxu0 0.0
        %1000 = vmatpush1.msra.mxu0 0.0
        %1001 = vmatprep.subr.mxu0 0.0
        %1002 = vmatpush1.msra.mxu0 0.0
        %1003 = vmatprep.subr.mxu0 0.0
        %1004 = vmatpush1.msra.mxu0 0.0
        %1005 = vmatprep.subr.mxu0 0.0
        %1006 = vmatpush1.msra.mxu0 0.0
        %1007 = vmatprep.subr.mxu0 0.0
        %1008 = vmatpush1.msra.mxu0 0.0
        %1009 = vmatprep.subr.mxu0 0.0
        %1010 = vmatpush1.msra.mxu0 0.0
        %1011 = vmatprep.subr.mxu0 0.0
        %1012 = vmatpush1.msra.mxu0 0.0
        %1013 = vmatprep.subr.mxu0 0.0
        %1014 = vmatpush1.msra.mxu0 0.0
        %1015 = vmatprep.subr.mxu0 0.0
        %1016 = vmatpush1.msra.mxu0 0.0
        %1017 = vmatprep.subr.mxu0 0.0
        %1018 = vmatpush1.msra.mxu0 0.0
        %1019 = vmatprep.subr.mxu0 0.0
        %1020 = vmatpush1.msra.mxu0 0.0
        %1021 = vmatprep.subr.mxu0 0.0
        %1022 = vmatpush1.msra.mxu0 0.0
        %1023 = vmatprep.subr.mxu0 0.0
        %1024 = vmatpush1.msra.mxu0 0.0
        %1025 = vmatprep.subr.mxu0 0.0
        %1026 = vmatpush1.msra.mxu0 0.0
        %1027 = vmatprep.subr.mxu0 0.0
        %1028 = vmatpush1.msra.mxu0 0.0
        %1029 = vmatprep.subr.mxu0 0.0
        %1030 = vmatpush1.msra.mxu0 0.0
        %1031 = vmatprep.subr.mxu0 0.0
        %1032 = vmatpush1.msra.mxu0 0.0
        %1033 = vmatprep.subr.mxu0 0.0
        %1034 = vmatpush1.msra.mxu0 0.0
        %1035 = vmatprep.subr.mxu0 0.0
        %1036 = vmatpush1.msra.mxu0 0.0
        %1037 = vmatprep.subr.mxu0 0.0
        %1038 = vmatpush1.msra.mxu0 0.0
        %1039 = vmatprep.subr.mxu0 0.0
        %1040 = vmatpush1.msra.mxu0 0.0
        %1041 = vmatprep.mubr.f32.mxu0 0.0
        %1042 = vmatmul.mubr.f32.gmra.mrb[0].mxu0 %v975
        %v1043 = vpop.f32.mrb[0].mxu0
        %v1044 = vadd.f32 0.0, %v1043
        %v1045 = vpop.f32.mrb[0].mxu0
        %1046 = vdwg.mxu0
        %v1048 = vsel %vm346, %v822, 0
        %1050 = vmatprep.subr.mxu0 0.0
        %1051 = vmatpush1.msra.mxu0 %v340
        %1052 = vmatprep.subr.mxu0 0.0
        %1053 = vmatpush1.msra.mxu0 0.0
        %1054 = vmatprep.subr.mxu0 0.0
        %1055 = vmatpush1.msra.mxu0 0.0
        %1056 = vmatprep.subr.mxu0 0.0
        %1057 = vmatpush1.msra.mxu0 0.0
        %1058 = vmatprep.subr.mxu0 0.0
        %1059 = vmatpush1.msra.mxu0 0.0
        %1060 = vmatprep.subr.mxu0 0.0
        %1061 = vmatpush1.msra.mxu0 0.0
        %1062 = vmatprep.subr.mxu0 0.0
        %1063 = vmatpush1.msra.mxu0 0.0
        %1064 = vmatprep.subr.mxu0 0.0
        %1065 = vmatpush1.msra.mxu0 0.0
        %1066 = vmatprep.subr.mxu0 0.0
        %1067 = vmatpush1.msra.mxu0 0.0
        %1068 = vmatprep.subr.mxu0 0.0
        %1069 = vmatpush1.msra.mxu0 0.0
        %1070 = vmatprep.subr.mxu0 0.0
        %1071 = vmatpush1.msra.mxu0 0.0
        %1072 = vmatprep.subr.mxu0 0.0
        %1073 = vmatpush1.msra.mxu0 0.0
        %1074 = vmatprep.subr.mxu0 0.0
        %1075 = vmatpush1.msra.mxu0 0.0
        %1076 = vmatprep.subr.mxu0 0.0
        %1077 = vmatpush1.msra.mxu0 0.0
        %1078 = vmatprep.subr.mxu0 0.0
        %1079 = vmatpush1.msra.mxu0 0.0
        %1080 = vmatprep.subr.mxu0 0.0
        %1081 = vmatpush1.msra.mxu0 0.0
        %1082 = vmatprep.subr.mxu0 0.0
        %1083 = vmatpush1.msra.mxu0 0.0
        %1084 = vmatprep.subr.mxu0 0.0
        %1085 = vmatpush1.msra.mxu0 0.0
        %1086 = vmatprep.subr.mxu0 0.0
        %1087 = vmatpush1.msra.mxu0 0.0
        %1088 = vmatprep.subr.mxu0 0.0
        %1089 = vmatpush1.msra.mxu0 0.0
        %1090 = vmatprep.subr.mxu0 0.0
        %1091 = vmatpush1.msra.mxu0 0.0
        %1092 = vmatprep.subr.mxu0 0.0
        %1093 = vmatpush1.msra.mxu0 0.0
        %1094 = vmatprep.subr.mxu0 0.0
        %1095 = vmatpush1.msra.mxu0 0.0
        %1096 = vmatprep.subr.mxu0 0.0
        %1097 = vmatpush1.msra.mxu0 0.0
        %1098 = vmatprep.subr.mxu0 0.0
        %1099 = vmatpush1.msra.mxu0 0.0
        %1100 = vmatprep.subr.mxu0 0.0
        %1101 = vmatpush1.msra.mxu0 0.0
        %1102 = vmatprep.subr.mxu0 0.0
        %1103 = vmatpush1.msra.mxu0 0.0
        %1104 = vmatprep.subr.mxu0 0.0
        %1105 = vmatpush1.msra.mxu0 0.0
        %1106 = vmatprep.subr.mxu0 0.0
        %1107 = vmatpush1.msra.mxu0 0.0
        %1108 = vmatprep.subr.mxu0 0.0
        %1109 = vmatpush1.msra.mxu0 0.0
        %1110 = vmatprep.subr.mxu0 0.0
        %1111 = vmatpush1.msra.mxu0 0.0
        %1112 = vmatprep.subr.mxu0 0.0
        %1113 = vmatpush1.msra.mxu0 0.0
        %1114 = vmatprep.mubr.f32.mxu0 0.0
        %1115 = vmatmul.mubr.f32.gmra.mrb[0].mxu0 %v1048
        %v1116 = vpop.f32.mrb[0].mxu0
        %v1117 = vadd.f32 0.0, %v1116
        %v1118 = vpop.f32.mrb[0].mxu0
        %1119 = vdwg.mxu0
        %1124 = vrot.lane.b32.xlu0 %v898, 16
        %v1125 = vpop.permute.xlu0 %1124
        %1126 = vrot.lane.b32.xlu0 %v971, 16
        %v1127 = vpop.permute.xlu0 %1126
        %1128 = vrot.lane.b32.xlu0 %v1044, 16
        %v1129 = vpop.permute.xlu0 %1128
        %1130 = vrot.lane.b32.xlu0 %v1117, 16
        %v1131 = vpop.permute.xlu0 %1130
        %vm1136 = vcmask 261248
        %1137 = vst.msk [vmem:[#allocation2] sm:$0xff] %vm1136, %v1125
        %1138 = vst.msk [vmem:[#allocation2 + $0x8] sm:$0xff] %vm1136, %v1127
        %1139 = vst.msk [vmem:[#allocation2 + $0x10] sm:$0xff] %vm1136, %v1129
        %1140 = vst.msk [vmem:[#allocation2 + $0x18] sm:$0xff] %vm1136, %v1131
        %1141 = vmatprep.subr.mxu0 0.0
        %1142 = vmatpush1.msra.mxu0 %v898
        %1143 = vmatprep.subr.mxu0 0.0
        %1144 = vmatpush1.msra.mxu0 0.0
        %1145 = vmatprep.subr.mxu0 0.0
        %1146 = vmatpush1.msra.mxu0 0.0
        %1147 = vmatprep.subr.mxu0 0.0
        %1148 = vmatpush1.msra.mxu0 0.0
        %1149 = vmatprep.subr.mxu0 0.0
        %1150 = vmatpush1.msra.mxu0 0.0
        %1151 = vmatprep.subr.mxu0 0.0
        %1152 = vmatpush1.msra.mxu0 0.0
        %1153 = vmatprep.subr.mxu0 0.0
        %1154 = vmatpush1.msra.mxu0 0.0
        %1155 = vmatprep.subr.mxu0 0.0
        %1156 = vmatpush1.msra.mxu0 0.0
        %1157 = vmatprep.subr.mxu0 0.0
        %1158 = vmatpush1.msra.mxu0 0.0
        %1159 = vmatprep.subr.mxu0 0.0
        %1160 = vmatpush1.msra.mxu0 0.0
        %1161 = vmatprep.subr.mxu0 0.0
        %1162 = vmatpush1.msra.mxu0 0.0
        %1163 = vmatprep.subr.mxu0 0.0
        %1164 = vmatpush1.msra.mxu0 0.0
        %1165 = vmatprep.subr.mxu0 0.0
        %1166 = vmatpush1.msra.mxu0 0.0
        %1167 = vmatprep.subr.mxu0 0.0
        %1168 = vmatpush1.msra.mxu0 0.0
        %1169 = vmatprep.subr.mxu0 0.0
        %1170 = vmatpush1.msra.mxu0 0.0
        %1171 = vmatprep.subr.mxu0 0.0
        %1172 = vmatpush1.msra.mxu0 0.0
        %1173 = vmatprep.subr.mxu0 0.0
        %1174 = vmatpush1.msra.mxu0 0.0
        %1175 = vmatprep.subr.mxu0 0.0
        %1176 = vmatpush1.msra.mxu0 0.0
        %1177 = vmatprep.subr.mxu0 0.0
        %1178 = vmatpush1.msra.mxu0 0.0
        %1179 = vmatprep.subr.mxu0 0.0
        %1180 = vmatpush1.msra.mxu0 0.0
        %1181 = vmatprep.subr.mxu0 0.0
        %1182 = vmatpush1.msra.mxu0 0.0
        %1183 = vmatprep.subr.mxu0 0.0
        %1184 = vmatpush1.msra.mxu0 0.0
        %1185 = vmatprep.subr.mxu0 0.0
        %1186 = vmatpush1.msra.mxu0 0.0
        %1187 = vmatprep.subr.mxu0 0.0
        %1188 = vmatpush1.msra.mxu0 0.0
        %1189 = vmatprep.subr.mxu0 0.0
        %1190 = vmatpush1.msra.mxu0 0.0
        %1191 = vmatprep.subr.mxu0 0.0
        %1192 = vmatpush1.msra.mxu0 0.0
        %1193 = vmatprep.subr.mxu0 0.0
        %1194 = vmatpush1.msra.mxu0 0.0
        %1195 = vmatprep.subr.mxu0 0.0
        %1196 = vmatpush1.msra.mxu0 0.0
        %1197 = vmatprep.subr.mxu0 0.0
        %1198 = vmatpush1.msra.mxu0 0.0
        %1199 = vmatprep.subr.mxu0 0.0
        %1200 = vmatpush1.msra.mxu0 0.0
        %1201 = vmatprep.subr.mxu0 0.0
        %1202 = vmatpush1.msra.mxu0 0.0
        %1203 = vmatprep.subr.mxu0 0.0
        %1204 = vmatpush1.msra.mxu0 0.0
        %1205 = vmatprep.mubr.f32.mxu0 0.0
        %1206 = vmatmul.mubr.f32.gmra.mrb[0].mxu0 %v829
        %v1207 = vpop.f32.mrb[0].mxu0
        %v1208 = vadd.f32 0.0, %v1207
        %v1209 = vpop.f32.mrb[0].mxu0
        %1210 = vdwg.mxu0
        %1211 = vmatprep.subr.mxu0 0.0
        %1212 = vmatpush1.msra.mxu0 %v971
        %1213 = vmatprep.subr.mxu0 0.0
        %1214 = vmatpush1.msra.mxu0 0.0
        %1215 = vmatprep.subr.mxu0 0.0
        %1216 = vmatpush1.msra.mxu0 0.0
        %1217 = vmatprep.subr.mxu0 0.0
        %1218 = vmatpush1.msra.mxu0 0.0
        %1219 = vmatprep.subr.mxu0 0.0
        %1220 = vmatpush1.msra.mxu0 0.0
        %1221 = vmatprep.subr.mxu0 0.0
        %1222 = vmatpush1.msra.mxu0 0.0
        %1223 = vmatprep.subr.mxu0 0.0
        %1224 = vmatpush1.msra.mxu0 0.0
        %1225 = vmatprep.subr.mxu0 0.0
        %1226 = vmatpush1.msra.mxu0 0.0
        %1227 = vmatprep.subr.mxu0 0.0
        %1228 = vmatpush1.msra.mxu0 0.0
        %1229 = vmatprep.subr.mxu0 0.0
        %1230 = vmatpush1.msra.mxu0 0.0
        %1231 = vmatprep.subr.mxu0 0.0
        %1232 = vmatpush1.msra.mxu0 0.0
        %1233 = vmatprep.subr.mxu0 0.0
        %1234 = vmatpush1.msra.mxu0 0.0
        %1235 = vmatprep.subr.mxu0 0.0
        %1236 = vmatpush1.msra.mxu0 0.0
        %1237 = vmatprep.subr.mxu0 0.0
        %1238 = vmatpush1.msra.mxu0 0.0
        %1239 = vmatprep.subr.mxu0 0.0
        %1240 = vmatpush1.msra.mxu0 0.0
        %1241 = vmatprep.subr.mxu0 0.0
        %1242 = vmatpush1.msra.mxu0 0.0
        %1243 = vmatprep.subr.mxu0 0.0
        %1244 = vmatpush1.msra.mxu0 0.0
        %1245 = vmatprep.subr.mxu0 0.0
        %1246 = vmatpush1.msra.mxu0 0.0
        %1247 = vmatprep.subr.mxu0 0.0
        %1248 = vmatpush1.msra.mxu0 0.0
        %1249 = vmatprep.subr.mxu0 0.0
        %1250 = vmatpush1.msra.mxu0 0.0
        %1251 = vmatprep.subr.mxu0 0.0
        %1252 = vmatpush1.msra.mxu0 0.0
        %1253 = vmatprep.subr.mxu0 0.0
        %1254 = vmatpush1.msra.mxu0 0.0
        %1255 = vmatprep.subr.mxu0 0.0
        %1256 = vmatpush1.msra.mxu0 0.0
        %1257 = vmatprep.subr.mxu0 0.0
        %1258 = vmatpush1.msra.mxu0 0.0
        %1259 = vmatprep.subr.mxu0 0.0
        %1260 = vmatpush1.msra.mxu0 0.0
        %1261 = vmatprep.subr.mxu0 0.0
        %1262 = vmatpush1.msra.mxu0 0.0
        %1263 = vmatprep.subr.mxu0 0.0
        %1264 = vmatpush1.msra.mxu0 0.0
        %1265 = vmatprep.subr.mxu0 0.0
        %1266 = vmatpush1.msra.mxu0 0.0
        %1267 = vmatprep.subr.mxu0 0.0
        %1268 = vmatpush1.msra.mxu0 0.0
        %1269 = vmatprep.subr.mxu0 0.0
        %1270 = vmatpush1.msra.mxu0 0.0
        %1271 = vmatprep.subr.mxu0 0.0
        %1272 = vmatpush1.msra.mxu0 0.0
        %1273 = vmatprep.subr.mxu0 0.0
        %1274 = vmatpush1.msra.mxu0 0.0
        %1275 = vmatprep.mubr.f32.mxu0 0.0
        %1276 = vmatmul.mubr.f32.gmra.mrb[0].mxu0 %v902
        %v1277 = vpop.f32.mrb[0].mxu0
        %v1278 = vadd.f32 0.0, %v1277
        %v1279 = vpop.f32.mrb[0].mxu0
        %1280 = vdwg.mxu0
        %1281 = vmatprep.subr.mxu0 0.0
        %1282 = vmatpush1.msra.mxu0 %v1044
        %1283 = vmatprep.subr.mxu0 0.0
        %1284 = vmatpush1.msra.mxu0 0.0
        %1285 = vmatprep.subr.mxu0 0.0
        %1286 = vmatpush1.msra.mxu0 0.0
        %1287 = vmatprep.subr.mxu0 0.0
        %1288 = vmatpush1.msra.mxu0 0.0
        %1289 = vmatprep.subr.mxu0 0.0
        %1290 = vmatpush1.msra.mxu0 0.0
        %1291 = vmatprep.subr.mxu0 0.0
        %1292 = vmatpush1.msra.mxu0 0.0
        %1293 = vmatprep.subr.mxu0 0.0
        %1294 = vmatpush1.msra.mxu0 0.0
        %1295 = vmatprep.subr.mxu0 0.0
        %1296 = vmatpush1.msra.mxu0 0.0
        %1297 = vmatprep.subr.mxu0 0.0
        %1298 = vmatpush1.msra.mxu0 0.0
        %1299 = vmatprep.subr.mxu0 0.0
        %1300 = vmatpush1.msra.mxu0 0.0
        %1301 = vmatprep.subr.mxu0 0.0
        %1302 = vmatpush1.msra.mxu0 0.0
        %1303 = vmatprep.subr.mxu0 0.0
        %1304 = vmatpush1.msra.mxu0 0.0
        %1305 = vmatprep.subr.mxu0 0.0
        %1306 = vmatpush1.msra.mxu0 0.0
        %1307 = vmatprep.subr.mxu0 0.0
        %1308 = vmatpush1.msra.mxu0 0.0
        %1309 = vmatprep.subr.mxu0 0.0
        %1310 = vmatpush1.msra.mxu0 0.0
        %1311 = vmatprep.subr.mxu0 0.0
        %1312 = vmatpush1.msra.mxu0 0.0
        %1313 = vmatprep.subr.mxu0 0.0
        %1314 = vmatpush1.msra.mxu0 0.0
        %1315 = vmatprep.subr.mxu0 0.0
        %1316 = vmatpush1.msra.mxu0 0.0
        %1317 = vmatprep.subr.mxu0 0.0
        %1318 = vmatpush1.msra.mxu0 0.0
        %1319 = vmatprep.subr.mxu0 0.0
        %1320 = vmatpush1.msra.mxu0 0.0
        %1321 = vmatprep.subr.mxu0 0.0
        %1322 = vmatpush1.msra.mxu0 0.0
        %1323 = vmatprep.subr.mxu0 0.0
        %1324 = vmatpush1.msra.mxu0 0.0
        %1325 = vmatprep.subr.mxu0 0.0
        %1326 = vmatpush1.msra.mxu0 0.0
        %1327 = vmatprep.subr.mxu0 0.0
        %1328 = vmatpush1.msra.mxu0 0.0
        %1329 = vmatprep.subr.mxu0 0.0
        %1330 = vmatpush1.msra.mxu0 0.0
        %1331 = vmatprep.subr.mxu0 0.0
        %1332 = vmatpush1.msra.mxu0 0.0
        %1333 = vmatprep.subr.mxu0 0.0
        %1334 = vmatpush1.msra.mxu0 0.0
        %1335 = vmatprep.subr.mxu0 0.0
        %1336 = vmatpush1.msra.mxu0 0.0
        %1337 = vmatprep.subr.mxu0 0.0
        %1338 = vmatpush1.msra.mxu0 0.0
        %1339 = vmatprep.subr.mxu0 0.0
        %1340 = vmatpush1.msra.mxu0 0.0
        %1341 = vmatprep.subr.mxu0 0.0
        %1342 = vmatpush1.msra.mxu0 0.0
        %1343 = vmatprep.subr.mxu0 0.0
        %1344 = vmatpush1.msra.mxu0 0.0
        %1345 = vmatprep.mubr.f32.mxu0 0.0
        %1346 = vmatmul.mubr.f32.gmra.mrb[0].mxu0 %v975
        %v1347 = vpop.f32.mrb[0].mxu0
        %v1348 = vadd.f32 0.0, %v1347
        %v1349 = vpop.f32.mrb[0].mxu0
        %1350 = vdwg.mxu0
        %1351 = vmatprep.subr.mxu0 0.0
        %1352 = vmatpush1.msra.mxu0 %v1117
        %1353 = vmatprep.subr.mxu0 0.0
        %1354 = vmatpush1.msra.mxu0 0.0
        %1355 = vmatprep.subr.mxu0 0.0
        %1356 = vmatpush1.msra.mxu0 0.0
        %1357 = vmatprep.subr.mxu0 0.0
        %1358 = vmatpush1.msra.mxu0 0.0
        %1359 = vmatprep.subr.mxu0 0.0
        %1360 = vmatpush1.msra.mxu0 0.0
        %1361 = vmatprep.subr.mxu0 0.0
        %1362 = vmatpush1.msra.mxu0 0.0
        %1363 = vmatprep.subr.mxu0 0.0
        %1364 = vmatpush1.msra.mxu0 0.0
        %1365 = vmatprep.subr.mxu0 0.0
        %1366 = vmatpush1.msra.mxu0 0.0
        %1367 = vmatprep.subr.mxu0 0.0
        %1368 = vmatpush1.msra.mxu0 0.0
        %1369 = vmatprep.subr.mxu0 0.0
        %1370 = vmatpush1.msra.mxu0 0.0
        %1371 = vmatprep.subr.mxu0 0.0
        %1372 = vmatpush1.msra.mxu0 0.0
        %1373 = vmatprep.subr.mxu0 0.0
        %1374 = vmatpush1.msra.mxu0 0.0
        %1375 = vmatprep.subr.mxu0 0.0
        %1376 = vmatpush1.msra.mxu0 0.0
        %1377 = vmatprep.subr.mxu0 0.0
        %1378 = vmatpush1.msra.mxu0 0.0
        %1379 = vmatprep.subr.mxu0 0.0
        %1380 = vmatpush1.msra.mxu0 0.0
        %1381 = vmatprep.subr.mxu0 0.0
        %1382 = vmatpush1.msra.mxu0 0.0
        %1383 = vmatprep.subr.mxu0 0.0
        %1384 = vmatpush1.msra.mxu0 0.0
        %1385 = vmatprep.subr.mxu0 0.0
        %1386 = vmatpush1.msra.mxu0 0.0
        %1387 = vmatprep.subr.mxu0 0.0
        %1388 = vmatpush1.msra.mxu0 0.0
        %1389 = vmatprep.subr.mxu0 0.0
        %1390 = vmatpush1.msra.mxu0 0.0
        %1391 = vmatprep.subr.mxu0 0.0
        %1392 = vmatpush1.msra.mxu0 0.0
        %1393 = vmatprep.subr.mxu0 0.0
        %1394 = vmatpush1.msra.mxu0 0.0
        %1395 = vmatprep.subr.mxu0 0.0
        %1396 = vmatpush1.msra.mxu0 0.0
        %1397 = vmatprep.subr.mxu0 0.0
        %1398 = vmatpush1.msra.mxu0 0.0
        %1399 = vmatprep.subr.mxu0 0.0
        %1400 = vmatpush1.msra.mxu0 0.0
        %1401 = vmatprep.subr.mxu0 0.0
        %1402 = vmatpush1.msra.mxu0 0.0
        %1403 = vmatprep.subr.mxu0 0.0
        %1404 = vmatpush1.msra.mxu0 0.0
        %1405 = vmatprep.subr.mxu0 0.0
        %1406 = vmatpush1.msra.mxu0 0.0
        %1407 = vmatprep.subr.mxu0 0.0
        %1408 = vmatpush1.msra.mxu0 0.0
        %1409 = vmatprep.subr.mxu0 0.0
        %1410 = vmatpush1.msra.mxu0 0.0
        %1411 = vmatprep.subr.mxu0 0.0
        %1412 = vmatpush1.msra.mxu0 0.0
        %1413 = vmatprep.subr.mxu0 0.0
        %1414 = vmatpush1.msra.mxu0 0.0
        %1415 = vmatprep.mubr.f32.mxu0 0.0
        %1416 = vmatmul.mubr.f32.gmra.mrb[0].mxu0 %v1048
        %v1417 = vpop.f32.mrb[0].mxu0
        %v1418 = vadd.f32 0.0, %v1417
        %v1419 = vpop.f32.mrb[0].mxu0
        %1420 = vdwg.mxu0
        %1425 = vrot.lane.b32.xlu0 %v1208, 32
        %v1426 = vpop.permute.xlu0 %1425
        %1427 = vrot.lane.b32.xlu0 %v1278, 32
        %v1428 = vpop.permute.xlu0 %1427
        %1429 = vrot.lane.b32.xlu0 %v1348, 32
        %v1430 = vpop.permute.xlu0 %1429
        %1431 = vrot.lane.b32.xlu0 %v1418, 32
        %v1432 = vpop.permute.xlu0 %1431
        %vm1437 = vcmask 392448
        %1438 = vst.msk [vmem:[#allocation2] sm:$0xff] %vm1437, %v1426
        %1439 = vst.msk [vmem:[#allocation2 + $0x8] sm:$0xff] %vm1437, %v1428
        %1440 = vst.msk [vmem:[#allocation2 + $0x10] sm:$0xff] %vm1437, %v1430
        %1441 = vst.msk [vmem:[#allocation2 + $0x18] sm:$0xff] %vm1437, %v1432
        %v1442 = vld [vmem:[#allocation2] sm:$0xff]
        %v1443 = vld [vmem:[#allocation2 + $0x8] sm:$0xff]
        %v1444 = vld [vmem:[#allocation2 + $0x10] sm:$0xff]
        %v1445 = vld [vmem:[#allocation2 + $0x18] sm:$0xff]
        %v1446 = vld [vmem:[%s3] sm:$0xff]
        %v1447 = vld [vmem:[%s3 + $0x8] sm:$0xff]
        %v1448 = vld [vmem:[%s3 + $0x10] sm:$0xff]
        %v1449 = vld [vmem:[%s3 + $0x18] sm:$0xff]
        %v1450 = vld [vmem:[%s3 + $0x20] sm:$0xff]
        %v1451 = vld [vmem:[%s3 + $0x28] sm:$0xff]
        %vm1452 = vcmask 392192
        %v1454 = vsel %vm1452, %v1442, 0
        %v1457 = vsel %vm1452, %v1443, 0
        %v1460 = vsel %vm1452, %v1444, 0
        %v1463 = vsel %vm1452, %v1445, 0
        %1465 = vmatprep.subr.mxu0 0.0
        %1466 = vmatpush1.msra.mxu0 %v1446
        %1467 = vmatprep.subr.mxu0 0.0
        %1468 = vmatpush1.msra.mxu0 %v1447
        %1469 = vmatprep.subr.mxu0 0.0
        %1470 = vmatpush1.msra.mxu0 %v1448
        %1471 = vmatprep.subr.mxu0 0.0
        %1472 = vmatpush1.msra.mxu0 %v1449
        %1473 = vmatprep.subr.mxu0 0.0
        %1474 = vmatpush1.msra.mxu0 %v1450
        %1475 = vmatprep.subr.mxu0 0.0
        %1476 = vmatpush1.msra.mxu0 %v1451
        %1477 = vmatprep.subr.mxu0 0.0
        %1478 = vmatpush1.msra.mxu0 0.0
        %1479 = vmatprep.subr.mxu0 0.0
        %1480 = vmatpush1.msra.mxu0 0.0
        %1481 = vmatprep.subr.mxu0 0.0
        %1482 = vmatpush1.msra.mxu0 0.0
        %1483 = vmatprep.subr.mxu0 0.0
        %1484 = vmatpush1.msra.mxu0 0.0
        %1485 = vmatprep.subr.mxu0 0.0
        %1486 = vmatpush1.msra.mxu0 0.0
        %1487 = vmatprep.subr.mxu0 0.0
        %1488 = vmatpush1.msra.mxu0 0.0
        %1489 = vmatprep.subr.mxu0 0.0
        %1490 = vmatpush1.msra.mxu0 0.0
        %1491 = vmatprep.subr.mxu0 0.0
        %1492 = vmatpush1.msra.mxu0 0.0
        %1493 = vmatprep.subr.mxu0 0.0
        %1494 = vmatpush1.msra.mxu0 0.0
        %1495 = vmatprep.subr.mxu0 0.0
        %1496 = vmatpush1.msra.mxu0 0.0
        %1497 = vmatprep.subr.mxu0 0.0
        %1498 = vmatpush1.msra.mxu0 0.0
        %1499 = vmatprep.subr.mxu0 0.0
        %1500 = vmatpush1.msra.mxu0 0.0
        %1501 = vmatprep.subr.mxu0 0.0
        %1502 = vmatpush1.msra.mxu0 0.0
        %1503 = vmatprep.subr.mxu0 0.0
        %1504 = vmatpush1.msra.mxu0 0.0
        %1505 = vmatprep.subr.mxu0 0.0
        %1506 = vmatpush1.msra.mxu0 0.0
        %1507 = vmatprep.subr.mxu0 0.0
        %1508 = vmatpush1.msra.mxu0 0.0
        %1509 = vmatprep.subr.mxu0 0.0
        %1510 = vmatpush1.msra.mxu0 0.0
        %1511 = vmatprep.subr.mxu0 0.0
        %1512 = vmatpush1.msra.mxu0 0.0
        %1513 = vmatprep.subr.mxu0 0.0
        %1514 = vmatpush1.msra.mxu0 0.0
        %1515 = vmatprep.subr.mxu0 0.0
        %1516 = vmatpush1.msra.mxu0 0.0
        %1517 = vmatprep.subr.mxu0 0.0
        %1518 = vmatpush1.msra.mxu0 0.0
        %1519 = vmatprep.subr.mxu0 0.0
        %1520 = vmatpush1.msra.mxu0 0.0
        %1521 = vmatprep.subr.mxu0 0.0
        %1522 = vmatpush1.msra.mxu0 0.0
        %1523 = vmatprep.subr.mxu0 0.0
        %1524 = vmatpush1.msra.mxu0 0.0
        %1525 = vmatprep.subr.mxu0 0.0
        %1526 = vmatpush1.msra.mxu0 0.0
        %1527 = vmatprep.subr.mxu0 0.0
        %1528 = vmatpush1.msra.mxu0 0.0
        %1529 = vmatprep.mubr.f32.mxu0 0.0
        %1530 = vmatmul.mubr.f32.gmra.mrb[0].mxu0 %v1454
        %v1531 = vpop.f32.mrb[0].mxu0
        %v1532 = vadd.f32 0.0, %v1531
        %v1533 = vpop.f32.mrb[0].mxu0
        %1534 = vmatprep.mubr.f32.mxu0 0.0
        %1535 = vmatmul.mubr.f32.gmra.mrb[0].mxu0 %v1457
        %v1536 = vpop.f32.mrb[0].mxu0
        %v1537 = vadd.f32 0.0, %v1536
        %v1538 = vpop.f32.mrb[0].mxu0
        %1539 = vmatprep.mubr.f32.mxu0 0.0
        %1540 = vmatmul.mubr.f32.gmra.mrb[0].mxu0 %v1460
        %v1541 = vpop.f32.mrb[0].mxu0
        %v1542 = vadd.f32 0.0, %v1541
        %v1543 = vpop.f32.mrb[0].mxu0
        %1544 = vmatprep.mubr.f32.mxu0 0.0
        %1545 = vmatmul.mubr.f32.gmra.mrb[0].mxu0 %v1463
        %v1546 = vpop.f32.mrb[0].mxu0
        %v1547 = vadd.f32 0.0, %v1546
        %v1548 = vpop.f32.mrb[0].mxu0
        %1549 = vdwg.mxu0
        %v1550 = vmax.f32 %v1532, 0.0
        %v1551 = vmax.f32 %v1537, 0.0
        %v1552 = vmax.f32 %v1542, 0.0
        %v1553 = vmax.f32 %v1547, 0.0
        %vm1554 = vcmask 31744
        %1555 = vst.msk [vmem:[%s313] sm:$0xff] %vm1554, %v1550
        %1556 = vst.msk [vmem:[%s313 + $0x8] sm:$0xff] %vm1554, %v1551
        %1557 = vst.msk [vmem:[%s313 + $0x10] sm:$0xff] %vm1554, %v1552
        %1558 = vst.msk [vmem:[%s313 + $0x18] sm:$0xff] %vm1554, %v1553
        %s1559 = smul.u32 4, %s23
        %p1560 = scmp.lt.s32.totalorder %s1559, 7
        %s1561 = scalar_select %p1560, %s1559, 7
        %s1562 = smul.addr %s1561, 8
        %s1563 = scalar_lea.vmem %s6, %s1562
        // Predicated region
        $region53: #{tpu_custom_call.1} parent=43 // pred_check
          %p1564 = pneg %p177
        $region54: #{tpu_custom_call.1} parent=43 // pred_check_branch
          %1566 = sbr.rel (%p1564) target = $region56
        $region55: #{tpu_custom_call.1} parent=43 // pred_region
          %s1567 = smul.u32 4, %s23
        $region56: #{tpu_custom_call.1} parent=43 // pred_fallthru
          _
      $region44: #{tpu_custom_call.1} parent=5 // pred_fallthru
        _
      %p1568 = scmp.le.s32.totalorder 2, %s18
      // Predicated region
      $region57: #{tpu_custom_call.1} parent=5 // pred_check
        %p1569 = pneg %p1568
      $region58: #{tpu_custom_call.1} parent=5 // pred_check_branch
        %1571 = sbr.rel (%p1569) target = $region60
      $region59: #{tpu_custom_call.1} parent=5 // pred_region
        %s1572 = ssub.s32 %s18, 2
        // Predicated region
        $region61: #{tpu_custom_call.1} parent=59 // pred_check
          %p1573 = pneg %p183
        $region62: #{tpu_custom_call.1} parent=59 // pred_check_branch
          %1575 = sbr.rel (%p1573) target = $region64
        $region63: #{tpu_custom_call.1} parent=59 // pred_region
          %s1576 = smul.u32 4, %s24
          %p1577 = scmp.lt.s32.totalorder %s1576, 7
          %s1578 = scalar_select %p1577, %s1576, 7
          %s1579 = smul.addr %s1578, 8
          %s1580 = scalar_lea.vmem %s6, %s1579
        $region64: #{tpu_custom_call.1} parent=59 // pred_fallthru
          _
      $region60: #{tpu_custom_call.1} parent=5 // pred_fallthru
        _
    $region6: #{tpu_custom_call.1} parent=1 // loop_footer
      %s22 = sadd.s32 1, %s18
    $region7: #{tpu_custom_call.1} parent=1 // loop_footer_branch
      %17 = sbr.rel target = $region3
    $region8: #{tpu_custom_call.1} parent=1 // loop_exit
      _
    %1581 = vsyncpa [#allocation4], 1
    %s1582 = scalar_lea.sflag [#allocation4], 1
    %1583 = vsyncpa %s1582, 1
    %1584 = vsyncpa [#allocation6], 1
    %s1585 = scalar_lea.sflag [#allocation6], 1
    %1586 = vsyncpa %s1585, 1

</llo_original>
